<compile_context>
chip_gen: v6e
topology: v6e:2x2x1
jax: 0.10.0
libtpu: 0.0.40
codegen_flags: <defaults>
</compile_context>

<pallas_src>
import jax
import jax.numpy as jnp
from jax.experimental import pallas as pl
from jax.experimental.pallas import tpu as pltpu

B = 20          # demo batch (small)
L = 16          # input length (implied by Linear1's 128*12)


def _round_up(n, m):
    return ((n + m - 1) // m) * m


def cnn_kernel(xu_ref, w1d_ref, b1d_ref, w2_ref, b2_ref,
               wl1_ref, bl1_ref, wl2_ref, bl2_ref, out_ref):
    bt = out_ref.shape[0]

    # ---- conv1 + ReLU: one MXU matmul on the im2col LHS --------------------
    # Tap-doubled weights: lanes 0:64 give conv1[t], lanes 64:128 give
    # conv1[t+1], so the pool1 output below is directly conv2's matmul LHS.
    xu = xu_ref[...].reshape(14 * bt, 8)                      # free view
    y1 = jnp.dot(xu, w1d_ref[...], preferred_element_type=jnp.float32)
    y1 = jnp.maximum(y1 + b1d_ref[...], 0.0)                  # (14*bt, 128) f32
    y1 = y1.reshape(14, bt, 128)                              # free view

    # ---- maxpool1 (k=2, s=1): max of whole (bt,128) slabs -------------------
    lhs2 = jnp.maximum(y1[0:13], y1[1:14])                    # (13, bt, 128)
    lhs2 = lhs2.reshape(13 * bt, 128).astype(jnp.bfloat16)

    # ---- conv2 (64->128, k=2) + ReLU: one MXU matmul, taps stacked along K --
    y2 = jnp.dot(lhs2, w2_ref[...], preferred_element_type=jnp.float32)
    y2 = jnp.maximum(y2 + b2_ref[...], 0.0)                   # (13*bt, 128) f32
    y2 = y2.reshape(13, bt, 128)                              # free view

    # ---- maxpool2 (k=2, s=1) -------------------------------------------------
    p2 = jnp.maximum(y2[0:12], y2[1:13]).astype(jnp.bfloat16)  # (12, bt, 128)

    # ---- Linear1 + ReLU: 12 accumulated K=128 MXU matmuls over the t axis ---
    # (no lane<->sublane flatten relayout; head is zero-padded to 128 lanes)
    h = jnp.dot(p2[0], wl1_ref[0], preferred_element_type=jnp.float32)
    for t in range(1, 12):
        h = h + jnp.dot(p2[t], wl1_ref[t], preferred_element_type=jnp.float32)
    h = jnp.maximum(h + bl1_ref[...], 0.0)                    # (bt, 128) f32

    # ---- Linear2 (N=1): VPU multiply + lane reduce (wl2 zero-padded) --------
    out = jnp.sum(h * wl2_ref[...], axis=-1, keepdims=True) + bl2_ref[...]
    out_ref[...] = out.astype(out_ref.dtype)                  # (bt, 1)


def pack_params(params):
    """One-time weight re-packing into the kernel's layout (hoisted glue)."""
    cw1, cb1, cw2, cb2, lw1, lb1, lw2, lb2 = params

    # conv1: tap-doubled, zero-padded to 8 im2col rows.
    w1 = jnp.transpose(cw1[:, 0, :])                          # (2, 64) [tap, c_out]
    z64 = jnp.zeros((64,), jnp.float32)
    w1d = jnp.stack([jnp.concatenate([w1[0], z64]),
                     jnp.concatenate([w1[1], w1[0]]),
                     jnp.concatenate([z64, w1[1]])])           # (3, 128)
    w1d = jnp.pad(w1d, ((0, 5), (0, 0))).astype(jnp.bfloat16)  # (8, 128)
    b1d = jnp.concatenate([cb1, cb1])[None, :]                 # (1, 128) f32

    # conv2: both taps stacked along K -> (128, 128) bf16.
    w2 = jnp.concatenate([jnp.transpose(cw2[:, :, 0]),
                          jnp.transpose(cw2[:, :, 1])],
                         axis=0).astype(jnp.bfloat16)          # (128, 128)
    b2 = cb2[None, :]                                          # (1, 128) f32

    # Linear1: PyTorch NCW flatten index is c*12 + t; kernel contracts over
    # (t, c), head zero-padded 50 -> 128 lanes.
    wl1 = jnp.transpose(lw1.reshape(50, 128, 12), (2, 1, 0))   # (12, 128, 50)
    wl1 = jnp.pad(wl1, ((0, 0), (0, 0), (0, 78))).astype(jnp.bfloat16)  # (12,128,128)
    bl1 = jnp.pad(lb1, (0, 78))[None, :]                       # (1, 128) f32
    wl2 = jnp.pad(lw2[0], (0, 78))[None, :]                    # (1, 128) f32
    bl2 = lb2[None, :]                                         # (1, 1) f32
    return (w1d, b1d, w2, b2, wl1, bl1, wl2, bl2)


def _pick_batch_tile(Bn, b_tile):
    """bt multiple of 16 (keeps bf16 leading-dim reshapes free)."""
    if b_tile is not None:
        return _round_up(min(b_tile, max(Bn, 1)), 16)
    if Bn <= 256:
        # Tiny batch: one grid step (per-step overhead would dominate).
        return _round_up(Bn, 16)
    # Large batch: >=2 parallel steps so v7x's 2 TensorCores both work; cap the
    # tile so f32 intermediates (~25 KB/row live peak) stay well inside VMEM on
    # every generation (v7x physical VMEM is only 64 MiB).
    return min(512, _round_up(pl.cdiv(Bn, 2), 16))


def cnn_pallas(x, packed, *, b_tile=None):
    """x: (B, 1, 16) float32 (PyTorch NCW). Returns (B, 1) float32."""
    w1d, b1d, w2, b2, wl1, bl1, wl2, bl2 = packed
    Bn = x.shape[0]
    x2 = x.reshape(Bn, L)                                      # (B, 16)

    bt = _pick_batch_tile(Bn, b_tile)
    B_pad = _round_up(Bn, bt)
    if B_pad != Bn:
        x2 = jnp.pad(x2, ((0, B_pad - Bn), (0, 0)))

    # im2col LHS for conv1, time-leading: x_unf[t, b, :] = [x[b,t], x[b,t+1],
    # x[b,t+2], 0, ...] for t = 0..13 (plain XLA, negligible extra HBM).
    idx = jnp.arange(14)[:, None] + jnp.arange(3)[None, :]     # (14, 3)
    x_unf = jnp.transpose(x2[:, idx], (1, 0, 2))               # (14, B_pad, 3)
    x_unf = jnp.pad(x_unf, ((0, 0), (0, 0), (0, 5))).astype(jnp.bfloat16)

    weights = (w1d, b1d, w2, b2, wl1, bl1, wl2, bl2)
    # Whole-array blocks with constant index_maps: DMA'd once, VMEM-resident
    # across all grid steps (Pallas skips re-copies for unchanged block index).
    w_specs = [pl.BlockSpec(a.shape, lambda i, n=a.ndim: (0,) * n)
               for a in weights]

    out = pl.pallas_call(
        cnn_kernel,
        out_shape=jax.ShapeDtypeStruct((B_pad, 1), jnp.float32),
        grid=(B_pad // bt,),
        in_specs=[pl.BlockSpec((14, bt, 8), lambda i: (0, i, 0))] + w_specs,
        out_specs=pl.BlockSpec((bt, 1), lambda i: (i, 0)),
        compiler_params=pltpu.CompilerParams(
            dimension_semantics=("parallel",),
            vmem_limit_bytes=48 * 1024 * 1024),
    )(x_unf, *weights)
    return out[:Bn]


def cnn_reference(x, params):
    """Pure-JAX f32 reference in PyTorch NCW layout."""
    cw1, cb1, cw2, cb2, lw1, lb1, lw2, lb2 = params
    taps1 = jnp.stack([x[:, :, 0:15], x[:, :, 1:16]], axis=-1)    # (B,1,15,2)
    y1 = jnp.einsum('bcik,ock->boi', taps1, cw1) + cb1[None, :, None]
    y1 = jnp.maximum(y1, 0.0)
    p1 = jnp.maximum(y1[:, :, 0:14], y1[:, :, 1:15])              # (B,64,14)
    taps2 = jnp.stack([p1[:, :, 0:13], p1[:, :, 1:14]], axis=-1)  # (B,64,13,2)
    y2 = jnp.einsum('bcik,ock->boi', taps2, cw2) + cb2[None, :, None]
    y2 = jnp.maximum(y2, 0.0)
    p2 = jnp.maximum(y2[:, :, 0:12], y2[:, :, 1:13])              # (B,128,12)
    flat = p2.reshape(p2.shape[0], -1)                            # (B,1536)
    h = jnp.maximum(flat @ lw1.T + lb1, 0.0)
    return h @ lw2.T + lb2                                        # (B,1)


def init_params(key):
    ks = jax.random.split(key, 8)
    cw1 = 0.2 * jax.random.normal(ks[0], (64, 1, 2), jnp.float32)
    cb1 = 0.1 * jax.random.normal(ks[1], (64,), jnp.float32)
    cw2 = 0.05 * jax.random.normal(ks[2], (128, 64, 2), jnp.float32)
    cb2 = 0.1 * jax.random.normal(ks[3], (128,), jnp.float32)
    lw1 = 0.02 * jax.random.normal(ks[4], (50, 128 * 12), jnp.float32)
    lb1 = 0.1 * jax.random.normal(ks[5], (50,), jnp.float32)
    lw2 = 0.1 * jax.random.normal(ks[6], (1, 50), jnp.float32)
    lb2 = 0.1 * jax.random.normal(ks[7], (1,), jnp.float32)
    return (cw1, cb1, cw2, cb2, lw1, lb1, lw2, lb2)


if __name__ == "__main__":
    key = jax.random.PRNGKey(0)
    pkey, xkey = jax.random.split(key)
    params = init_params(pkey)
    x = jax.random.normal(xkey, (B, 1, L), jnp.float32)

    packed = pack_params(params)            # one-time prepare step
    out = cnn_pallas(x, packed)             # B=20 -> bt=32, grid=(1,)
    out = jax.block_until_ready(out)

    ref = cnn_reference(x, params)
    assert out.shape == (B, 1), out.shape
    # bf16 MXU operands with f32 accumulation -> bf16-appropriate tolerance.
    assert jnp.allclose(out, ref, rtol=2e-2, atol=2e-2), (out, ref)

    print("KERNEL_OK")
</pallas_src>

<mosaic_0001>
module attributes {stable_mosaic.version = 11 : i64} {
  func.func @cnn_kernel(%arg0: i32, %arg1: memref<14x32x8xbf16, #tpu.memory_space<vmem>>, %arg2: memref<8x128xbf16, #tpu.memory_space<vmem>>, %arg3: memref<1x128xf32, #tpu.memory_space<vmem>>, %arg4: memref<128x128xbf16, #tpu.memory_space<vmem>>, %arg5: memref<1x128xf32, #tpu.memory_space<vmem>>, %arg6: memref<12x128x128xbf16, #tpu.memory_space<vmem>>, %arg7: memref<1x128xf32, #tpu.memory_space<vmem>>, %arg8: memref<1x128xf32, #tpu.memory_space<vmem>>, %arg9: memref<1x1xf32, #tpu.memory_space<vmem>>, %arg10: memref<32x1xf32, #tpu.memory_space<vmem>>) attributes {dimension_semantics = [#tpu.dimension_semantics<parallel>], iteration_bounds = array<i64: 1>, scalar_prefetch = 0 : i64, scratch_operands = 0 : i64, tpu.core_type = #tpu.core_type<tc>, window_params = [{transform_indices = @transform_0, window_bounds = array<i64: 14, 32, 8>}, {pipeline_mode = #tpu.pipeline_mode<synchronous>, transform_indices = @transform_1, window_bounds = array<i64: 8, 128>}, {pipeline_mode = #tpu.pipeline_mode<synchronous>, transform_indices = @transform_2, window_bounds = array<i64: 1, 128>}, {pipeline_mode = #tpu.pipeline_mode<synchronous>, transform_indices = @transform_3, window_bounds = array<i64: 128, 128>}, {pipeline_mode = #tpu.pipeline_mode<synchronous>, transform_indices = @transform_4, window_bounds = array<i64: 1, 128>}, {pipeline_mode = #tpu.pipeline_mode<synchronous>, transform_indices = @transform_5, window_bounds = array<i64: 12, 128, 128>}, {pipeline_mode = #tpu.pipeline_mode<synchronous>, transform_indices = @transform_6, window_bounds = array<i64: 1, 128>}, {pipeline_mode = #tpu.pipeline_mode<synchronous>, transform_indices = @transform_7, window_bounds = array<i64: 1, 128>}, {pipeline_mode = #tpu.pipeline_mode<synchronous>, transform_indices = @transform_8, window_bounds = array<i64: 1, 1>}, {transform_indices = @transform_9, window_bounds = array<i64: 32, 1>}]} {
    %c0 = arith.constant 0 : index
    %c0_0 = arith.constant 0 : index
    %c0_1 = arith.constant 0 : index
    %0 = vector.load %arg1[%c0, %c0_0, %c0_1] : memref<14x32x8xbf16, #tpu.memory_space<vmem>>, vector<14x32x8xbf16>
    %1 = vector.shape_cast %0 : vector<14x32x8xbf16> to vector<448x8xbf16>
    %c0_2 = arith.constant 0 : index
    %c0_3 = arith.constant 0 : index
    %2 = vector.load %arg2[%c0_2, %c0_3] : memref<8x128xbf16, #tpu.memory_space<vmem>>, vector<8x128xbf16>
    %cst = arith.constant dense<0.000000e+00> : vector<448x128xf32>
    %3 = tpu.matmul %1, %2, %cst {dimension_numbers = #tpu.dot_dimension_numbers<[1], [0], [0], [1], [0, 0, 1, 1], [], []>} : vector<448x8xbf16>, vector<8x128xbf16>, vector<448x128xf32> -> vector<448x128xf32>
    %c0_4 = arith.constant 0 : index
    %c0_5 = arith.constant 0 : index
    %4 = vector.load %arg3[%c0_4, %c0_5] : memref<1x128xf32, #tpu.memory_space<vmem>>, vector<1x128xf32>
    %5 = vector.broadcast %4 : vector<1x128xf32> to vector<448x128xf32>
    %6 = arith.addf %3, %5 : vector<448x128xf32>
    %cst_6 = arith.constant 0.000000e+00 : f32
    %7 = vector.broadcast %cst_6 : f32 to vector<448x128xf32>
    %8 = arith.maximumf %6, %7 : vector<448x128xf32>
    %9 = vector.shape_cast %8 : vector<448x128xf32> to vector<14x32x128xf32>
    %10 = vector.extract_strided_slice %9 {offsets = [0, 0, 0], sizes = [13, 32, 128], strides = [1, 1, 1]} : vector<14x32x128xf32> to vector<13x32x128xf32>
    %11 = vector.extract_strided_slice %9 {offsets = [1, 0, 0], sizes = [13, 32, 128], strides = [1, 1, 1]} : vector<14x32x128xf32> to vector<13x32x128xf32>
    %12 = arith.maximumf %10, %11 : vector<13x32x128xf32>
    %13 = vector.shape_cast %12 : vector<13x32x128xf32> to vector<416x128xf32>
    %14 = arith.truncf %13 : vector<416x128xf32> to vector<416x128xbf16>
    %c0_7 = arith.constant 0 : index
    %c0_8 = arith.constant 0 : index
    %15 = vector.load %arg4[%c0_7, %c0_8] : memref<128x128xbf16, #tpu.memory_space<vmem>>, vector<128x128xbf16>
    %cst_9 = arith.constant dense<0.000000e+00> : vector<416x128xf32>
    %16 = tpu.matmul %14, %15, %cst_9 {dimension_numbers = #tpu.dot_dimension_numbers<[1], [0], [0], [1], [0, 0, 1, 1], [], []>} : vector<416x128xbf16>, vector<128x128xbf16>, vector<416x128xf32> -> vector<416x128xf32>
    %c0_10 = arith.constant 0 : index
    %c0_11 = arith.constant 0 : index
    %17 = vector.load %arg5[%c0_10, %c0_11] : memref<1x128xf32, #tpu.memory_space<vmem>>, vector<1x128xf32>
    %18 = vector.broadcast %17 : vector<1x128xf32> to vector<416x128xf32>
    %19 = arith.addf %16, %18 : vector<416x128xf32>
    %cst_12 = arith.constant 0.000000e+00 : f32
    %20 = vector.broadcast %cst_12 : f32 to vector<416x128xf32>
    %21 = arith.maximumf %19, %20 : vector<416x128xf32>
    %22 = vector.shape_cast %21 : vector<416x128xf32> to vector<13x32x128xf32>
    %23 = vector.extract_strided_slice %22 {offsets = [0, 0, 0], sizes = [12, 32, 128], strides = [1, 1, 1]} : vector<13x32x128xf32> to vector<12x32x128xf32>
    %24 = vector.extract_strided_slice %22 {offsets = [1, 0, 0], sizes = [12, 32, 128], strides = [1, 1, 1]} : vector<13x32x128xf32> to vector<12x32x128xf32>
    %25 = arith.maximumf %23, %24 : vector<12x32x128xf32>
    %26 = arith.truncf %25 : vector<12x32x128xf32> to vector<12x32x128xbf16>
    %27 = vector.extract_strided_slice %26 {offsets = [0, 0, 0], sizes = [1, 32, 128], strides = [1, 1, 1]} : vector<12x32x128xbf16> to vector<1x32x128xbf16>
    %28 = vector.shape_cast %27 : vector<1x32x128xbf16> to vector<32x128xbf16>
    %c0_13 = arith.constant 0 : index
    %c0_14 = arith.constant 0 : index
    %c0_15 = arith.constant 0 : index
    %29 = vector.load %arg6[%c0_13, %c0_14, %c0_15] : memref<12x128x128xbf16, #tpu.memory_space<vmem>>, vector<1x128x128xbf16>
    %30 = vector.shape_cast %29 : vector<1x128x128xbf16> to vector<128x128xbf16>
    %cst_16 = arith.constant dense<0.000000e+00> : vector<32x128xf32>
    %31 = tpu.matmul %28, %30, %cst_16 {dimension_numbers = #tpu.dot_dimension_numbers<[1], [0], [0], [1], [0, 0, 1, 1], [], []>} : vector<32x128xbf16>, vector<128x128xbf16>, vector<32x128xf32> -> vector<32x128xf32>
    %32 = vector.extract_strided_slice %26 {offsets = [1, 0, 0], sizes = [1, 32, 128], strides = [1, 1, 1]} : vector<12x32x128xbf16> to vector<1x32x128xbf16>
    %33 = vector.shape_cast %32 : vector<1x32x128xbf16> to vector<32x128xbf16>
    %c1 = arith.constant 1 : index
    %c0_17 = arith.constant 0 : index
    %c0_18 = arith.constant 0 : index
    %34 = vector.load %arg6[%c1, %c0_17, %c0_18] : memref<12x128x128xbf16, #tpu.memory_space<vmem>>, vector<1x128x128xbf16>
    %35 = vector.shape_cast %34 : vector<1x128x128xbf16> to vector<128x128xbf16>
    %cst_19 = arith.constant dense<0.000000e+00> : vector<32x128xf32>
    %36 = tpu.matmul %33, %35, %cst_19 {dimension_numbers = #tpu.dot_dimension_numbers<[1], [0], [0], [1], [0, 0, 1, 1], [], []>} : vector<32x128xbf16>, vector<128x128xbf16>, vector<32x128xf32> -> vector<32x128xf32>
    %37 = arith.addf %31, %36 : vector<32x128xf32>
    %38 = vector.extract_strided_slice %26 {offsets = [2, 0, 0], sizes = [1, 32, 128], strides = [1, 1, 1]} : vector<12x32x128xbf16> to vector<1x32x128xbf16>
    %39 = vector.shape_cast %38 : vector<1x32x128xbf16> to vector<32x128xbf16>
    %c2 = arith.constant 2 : index
    %c0_20 = arith.constant 0 : index
    %c0_21 = arith.constant 0 : index
    %40 = vector.load %arg6[%c2, %c0_20, %c0_21] : memref<12x128x128xbf16, #tpu.memory_space<vmem>>, vector<1x128x128xbf16>
    %41 = vector.shape_cast %40 : vector<1x128x128xbf16> to vector<128x128xbf16>
    %cst_22 = arith.constant dense<0.000000e+00> : vector<32x128xf32>
    %42 = tpu.matmul %39, %41, %cst_22 {dimension_numbers = #tpu.dot_dimension_numbers<[1], [0], [0], [1], [0, 0, 1, 1], [], []>} : vector<32x128xbf16>, vector<128x128xbf16>, vector<32x128xf32> -> vector<32x128xf32>
    %43 = arith.addf %37, %42 : vector<32x128xf32>
    %44 = vector.extract_strided_slice %26 {offsets = [3, 0, 0], sizes = [1, 32, 128], strides = [1, 1, 1]} : vector<12x32x128xbf16> to vector<1x32x128xbf16>
    %45 = vector.shape_cast %44 : vector<1x32x128xbf16> to vector<32x128xbf16>
    %c3 = arith.constant 3 : index
    %c0_23 = arith.constant 0 : index
    %c0_24 = arith.constant 0 : index
    %46 = vector.load %arg6[%c3, %c0_23, %c0_24] : memref<12x128x128xbf16, #tpu.memory_space<vmem>>, vector<1x128x128xbf16>
    %47 = vector.shape_cast %46 : vector<1x128x128xbf16> to vector<128x128xbf16>
    %cst_25 = arith.constant dense<0.000000e+00> : vector<32x128xf32>
    %48 = tpu.matmul %45, %47, %cst_25 {dimension_numbers = #tpu.dot_dimension_numbers<[1], [0], [0], [1], [0, 0, 1, 1], [], []>} : vector<32x128xbf16>, vector<128x128xbf16>, vector<32x128xf32> -> vector<32x128xf32>
    %49 = arith.addf %43, %48 : vector<32x128xf32>
    %50 = vector.extract_strided_slice %26 {offsets = [4, 0, 0], sizes = [1, 32, 128], strides = [1, 1, 1]} : vector<12x32x128xbf16> to vector<1x32x128xbf16>
    %51 = vector.shape_cast %50 : vector<1x32x128xbf16> to vector<32x128xbf16>
    %c4 = arith.constant 4 : index
    %c0_26 = arith.constant 0 : index
    %c0_27 = arith.constant 0 : index
    %52 = vector.load %arg6[%c4, %c0_26, %c0_27] : memref<12x128x128xbf16, #tpu.memory_space<vmem>>, vector<1x128x128xbf16>
    %53 = vector.shape_cast %52 : vector<1x128x128xbf16> to vector<128x128xbf16>
    %cst_28 = arith.constant dense<0.000000e+00> : vector<32x128xf32>
    %54 = tpu.matmul %51, %53, %cst_28 {dimension_numbers = #tpu.dot_dimension_numbers<[1], [0], [0], [1], [0, 0, 1, 1], [], []>} : vector<32x128xbf16>, vector<128x128xbf16>, vector<32x128xf32> -> vector<32x128xf32>
    %55 = arith.addf %49, %54 : vector<32x128xf32>
    %56 = vector.extract_strided_slice %26 {offsets = [5, 0, 0], sizes = [1, 32, 128], strides = [1, 1, 1]} : vector<12x32x128xbf16> to vector<1x32x128xbf16>
    %57 = vector.shape_cast %56 : vector<1x32x128xbf16> to vector<32x128xbf16>
    %c5 = arith.constant 5 : index
    %c0_29 = arith.constant 0 : index
    %c0_30 = arith.constant 0 : index
    %58 = vector.load %arg6[%c5, %c0_29, %c0_30] : memref<12x128x128xbf16, #tpu.memory_space<vmem>>, vector<1x128x128xbf16>
    %59 = vector.shape_cast %58 : vector<1x128x128xbf16> to vector<128x128xbf16>
    %cst_31 = arith.constant dense<0.000000e+00> : vector<32x128xf32>
    %60 = tpu.matmul %57, %59, %cst_31 {dimension_numbers = #tpu.dot_dimension_numbers<[1], [0], [0], [1], [0, 0, 1, 1], [], []>} : vector<32x128xbf16>, vector<128x128xbf16>, vector<32x128xf32> -> vector<32x128xf32>
    %61 = arith.addf %55, %60 : vector<32x128xf32>
    %62 = vector.extract_strided_slice %26 {offsets = [6, 0, 0], sizes = [1, 32, 128], strides = [1, 1, 1]} : vector<12x32x128xbf16> to vector<1x32x128xbf16>
    %63 = vector.shape_cast %62 : vector<1x32x128xbf16> to vector<32x128xbf16>
    %c6 = arith.constant 6 : index
    %c0_32 = arith.constant 0 : index
    %c0_33 = arith.constant 0 : index
    %64 = vector.load %arg6[%c6, %c0_32, %c0_33] : memref<12x128x128xbf16, #tpu.memory_space<vmem>>, vector<1x128x128xbf16>
    %65 = vector.shape_cast %64 : vector<1x128x128xbf16> to vector<128x128xbf16>
    %cst_34 = arith.constant dense<0.000000e+00> : vector<32x128xf32>
    %66 = tpu.matmul %63, %65, %cst_34 {dimension_numbers = #tpu.dot_dimension_numbers<[1], [0], [0], [1], [0, 0, 1, 1], [], []>} : vector<32x128xbf16>, vector<128x128xbf16>, vector<32x128xf32> -> vector<32x128xf32>
    %67 = arith.addf %61, %66 : vector<32x128xf32>
    %68 = vector.extract_strided_slice %26 {offsets = [7, 0, 0], sizes = [1, 32, 128], strides = [1, 1, 1]} : vector<12x32x128xbf16> to vector<1x32x128xbf16>
    %69 = vector.shape_cast %68 : vector<1x32x128xbf16> to vector<32x128xbf16>
    %c7 = arith.constant 7 : index
    %c0_35 = arith.constant 0 : index
    %c0_36 = arith.constant 0 : index
    %70 = vector.load %arg6[%c7, %c0_35, %c0_36] : memref<12x128x128xbf16, #tpu.memory_space<vmem>>, vector<1x128x128xbf16>
    %71 = vector.shape_cast %70 : vector<1x128x128xbf16> to vector<128x128xbf16>
    %cst_37 = arith.constant dense<0.000000e+00> : vector<32x128xf32>
    %72 = tpu.matmul %69, %71, %cst_37 {dimension_numbers = #tpu.dot_dimension_numbers<[1], [0], [0], [1], [0, 0, 1, 1], [], []>} : vector<32x128xbf16>, vector<128x128xbf16>, vector<32x128xf32> -> vector<32x128xf32>
    %73 = arith.addf %67, %72 : vector<32x128xf32>
    %74 = vector.extract_strided_slice %26 {offsets = [8, 0, 0], sizes = [1, 32, 128], strides = [1, 1, 1]} : vector<12x32x128xbf16> to vector<1x32x128xbf16>
    %75 = vector.shape_cast %74 : vector<1x32x128xbf16> to vector<32x128xbf16>
    %c8 = arith.constant 8 : index
    %c0_38 = arith.constant 0 : index
    %c0_39 = arith.constant 0 : index
    %76 = vector.load %arg6[%c8, %c0_38, %c0_39] : memref<12x128x128xbf16, #tpu.memory_space<vmem>>, vector<1x128x128xbf16>
    %77 = vector.shape_cast %76 : vector<1x128x128xbf16> to vector<128x128xbf16>
    %cst_40 = arith.constant dense<0.000000e+00> : vector<32x128xf32>
    %78 = tpu.matmul %75, %77, %cst_40 {dimension_numbers = #tpu.dot_dimension_numbers<[1], [0], [0], [1], [0, 0, 1, 1], [], []>} : vector<32x128xbf16>, vector<128x128xbf16>, vector<32x128xf32> -> vector<32x128xf32>
    %79 = arith.addf %73, %78 : vector<32x128xf32>
    %80 = vector.extract_strided_slice %26 {offsets = [9, 0, 0], sizes = [1, 32, 128], strides = [1, 1, 1]} : vector<12x32x128xbf16> to vector<1x32x128xbf16>
    %81 = vector.shape_cast %80 : vector<1x32x128xbf16> to vector<32x128xbf16>
    %c9 = arith.constant 9 : index
    %c0_41 = arith.constant 0 : index
    %c0_42 = arith.constant 0 : index
    %82 = vector.load %arg6[%c9, %c0_41, %c0_42] : memref<12x128x128xbf16, #tpu.memory_space<vmem>>, vector<1x128x128xbf16>
    %83 = vector.shape_cast %82 : vector<1x128x128xbf16> to vector<128x128xbf16>
    %cst_43 = arith.constant dense<0.000000e+00> : vector<32x128xf32>
    %84 = tpu.matmul %81, %83, %cst_43 {dimension_numbers = #tpu.dot_dimension_numbers<[1], [0], [0], [1], [0, 0, 1, 1], [], []>} : vector<32x128xbf16>, vector<128x128xbf16>, vector<32x128xf32> -> vector<32x128xf32>
    %85 = arith.addf %79, %84 : vector<32x128xf32>
    %86 = vector.extract_strided_slice %26 {offsets = [10, 0, 0], sizes = [1, 32, 128], strides = [1, 1, 1]} : vector<12x32x128xbf16> to vector<1x32x128xbf16>
    %87 = vector.shape_cast %86 : vector<1x32x128xbf16> to vector<32x128xbf16>
    %c10 = arith.constant 10 : index
    %c0_44 = arith.constant 0 : index
    %c0_45 = arith.constant 0 : index
    %88 = vector.load %arg6[%c10, %c0_44, %c0_45] : memref<12x128x128xbf16, #tpu.memory_space<vmem>>, vector<1x128x128xbf16>
    %89 = vector.shape_cast %88 : vector<1x128x128xbf16> to vector<128x128xbf16>
    %cst_46 = arith.constant dense<0.000000e+00> : vector<32x128xf32>
    %90 = tpu.matmul %87, %89, %cst_46 {dimension_numbers = #tpu.dot_dimension_numbers<[1], [0], [0], [1], [0, 0, 1, 1], [], []>} : vector<32x128xbf16>, vector<128x128xbf16>, vector<32x128xf32> -> vector<32x128xf32>
    %91 = arith.addf %85, %90 : vector<32x128xf32>
    %92 = vector.extract_strided_slice %26 {offsets = [11, 0, 0], sizes = [1, 32, 128], strides = [1, 1, 1]} : vector<12x32x128xbf16> to vector<1x32x128xbf16>
    %93 = vector.shape_cast %92 : vector<1x32x128xbf16> to vector<32x128xbf16>
    %c11 = arith.constant 11 : index
    %c0_47 = arith.constant 0 : index
    %c0_48 = arith.constant 0 : index
    %94 = vector.load %arg6[%c11, %c0_47, %c0_48] : memref<12x128x128xbf16, #tpu.memory_space<vmem>>, vector<1x128x128xbf16>
    %95 = vector.shape_cast %94 : vector<1x128x128xbf16> to vector<128x128xbf16>
    %cst_49 = arith.constant dense<0.000000e+00> : vector<32x128xf32>
    %96 = tpu.matmul %93, %95, %cst_49 {dimension_numbers = #tpu.dot_dimension_numbers<[1], [0], [0], [1], [0, 0, 1, 1], [], []>} : vector<32x128xbf16>, vector<128x128xbf16>, vector<32x128xf32> -> vector<32x128xf32>
    %97 = arith.addf %91, %96 : vector<32x128xf32>
    %c0_50 = arith.constant 0 : index
    %c0_51 = arith.constant 0 : index
    %98 = vector.load %arg7[%c0_50, %c0_51] : memref<1x128xf32, #tpu.memory_space<vmem>>, vector<1x128xf32>
    %99 = vector.broadcast %98 : vector<1x128xf32> to vector<32x128xf32>
    %100 = arith.addf %97, %99 : vector<32x128xf32>
    %cst_52 = arith.constant 0.000000e+00 : f32
    %101 = vector.broadcast %cst_52 : f32 to vector<32x128xf32>
    %102 = arith.maximumf %100, %101 : vector<32x128xf32>
    %c0_53 = arith.constant 0 : index
    %c0_54 = arith.constant 0 : index
    %103 = vector.load %arg8[%c0_53, %c0_54] : memref<1x128xf32, #tpu.memory_space<vmem>>, vector<1x128xf32>
    %104 = vector.broadcast %103 : vector<1x128xf32> to vector<32x128xf32>
    %105 = arith.mulf %102, %104 : vector<32x128xf32>
    %cst_55 = arith.constant dense<0.000000e+00> : vector<32xf32>
    %106 = vector.multi_reduction <add>, %105, %cst_55 [1] : vector<32x128xf32> to vector<32xf32>
    %107 = vector.shape_cast %106 : vector<32xf32> to vector<32x1xf32>
    %c0_56 = arith.constant 0 : index
    %c0_57 = arith.constant 0 : index
    %108 = vector.load %arg9[%c0_56, %c0_57] : memref<1x1xf32, #tpu.memory_space<vmem>>, vector<1x1xf32>
    %109 = vector.broadcast %108 : vector<1x1xf32> to vector<32x1xf32>
    %110 = arith.addf %107, %109 : vector<32x1xf32>
    %c0_58 = arith.constant 0 : index
    %c0_59 = arith.constant 0 : index
    %111 = vector.load %arg10[%c0_58, %c0_59] : memref<32x1xf32, #tpu.memory_space<vmem>>, vector<32x1xf32>
    tpu.vector_store %arg10[%c0_58, %c0_59], %110 {strides = array<i32>} : memref<32x1xf32, #tpu.memory_space<vmem>>, vector<32x1xf32>,
    return
  }
  func.func @transform_0(%arg0: i32) -> (i32, i32, i32) {
    %c0_i32 = arith.constant 0 : i32
    %c0_i32_0 = arith.constant 0 : i32
    %c0_i32_1 = arith.constant 0 : i32
    return %c0_i32, %arg0, %c0_i32_0 : i32, i32, i32
  }
  func.func @transform_1(%arg0: i32) -> (i32, i32) {
    %c0_i32 = arith.constant 0 : i32
    %c0_i32_0 = arith.constant 0 : i32
    %c0_i32_1 = arith.constant 0 : i32
    return %c0_i32, %c0_i32_0 : i32, i32
  }
  func.func @transform_2(%arg0: i32) -> (i32, i32) {
    %c0_i32 = arith.constant 0 : i32
    %c0_i32_0 = arith.constant 0 : i32
    %c0_i32_1 = arith.constant 0 : i32
    return %c0_i32, %c0_i32_0 : i32, i32
  }
  func.func @transform_3(%arg0: i32) -> (i32, i32) {
    %c0_i32 = arith.constant 0 : i32
    %c0_i32_0 = arith.constant 0 : i32
    %c0_i32_1 = arith.constant 0 : i32
    return %c0_i32, %c0_i32_0 : i32, i32
  }
  func.func @transform_4(%arg0: i32) -> (i32, i32) {
    %c0_i32 = arith.constant 0 : i32
    %c0_i32_0 = arith.constant 0 : i32
    %c0_i32_1 = arith.constant 0 : i32
    return %c0_i32, %c0_i32_0 : i32, i32
  }
  func.func @transform_5(%arg0: i32) -> (i32, i32, i32) {
    %c0_i32 = arith.constant 0 : i32
    %c0_i32_0 = arith.constant 0 : i32
    %c0_i32_1 = arith.constant 0 : i32
    %c0_i32_2 = arith.constant 0 : i32
    return %c0_i32, %c0_i32_0, %c0_i32_1 : i32, i32, i32
  }
  func.func @transform_6(%arg0: i32) -> (i32, i32) {
    %c0_i32 = arith.constant 0 : i32
    %c0_i32_0 = arith.constant 0 : i32
    %c0_i32_1 = arith.constant 0 : i32
    return %c0_i32, %c0_i32_0 : i32, i32
  }
  func.func @transform_7(%arg0: i32) -> (i32, i32) {
    %c0_i32 = arith.constant 0 : i32
    %c0_i32_0 = arith.constant 0 : i32
    %c0_i32_1 = arith.constant 0 : i32
    return %c0_i32, %c0_i32_0 : i32, i32
  }
  func.func @transform_8(%arg0: i32) -> (i32, i32) {
    %c0_i32 = arith.constant 0 : i32
    %c0_i32_0 = arith.constant 0 : i32
    %c0_i32_1 = arith.constant 0 : i32
    return %c0_i32, %c0_i32_0 : i32, i32
  }
  func.func @transform_9(%arg0: i32) -> (i32, i32) {
    %c0_i32 = arith.constant 0 : i32
    %c0_i32_0 = arith.constant 0 : i32
    return %arg0, %c0_i32 : i32, i32
  }
}

</mosaic_0001>

<llo_original>
// kernel: tpu_custom_call.1
$region0: #{tpu_custom_call.1}
  #allocation0 [shape = 'u32[]', space=smem, size = 0x4, offset = 0x4, fixed_abs, tag = 'smem constant byte address 0x4 - core index']
  #allocation1 [shape = 'u32[144,128]{1,0:T(1,128)}', space=vmem, size = 0x12000, scoped, tag = 'internal scratch']
  #allocation2 [shape = 'f32[1,1]{1,0:T(1,128)S(1)}', space=vmem, size = 0x200, scoped, tag = 'scoped memory for tpu_custom_call.1']
  %s0 = inlined_call_operand.vmem [shape: bf16[14,32,8], index: 0, kind: input, shape index: {}]
  %s1 = inlined_call_operand.vmem [shape: bf16[8,128], index: 1, kind: input, shape index: {}]
  %s2 = inlined_call_operand.vmem [shape: f32[1,128], index: 2, kind: input, shape index: {}]
  %s3 = inlined_call_operand.vmem [shape: bf16[128,128], index: 3, kind: input, shape index: {}]
  %s4 = inlined_call_operand.vmem [shape: f32[1,128], index: 4, kind: input, shape index: {}]
  %s5 = inlined_call_operand.hbm [shape: bf16[12,128,128], index: 5, kind: input, shape index: {}]
  %s6 = inlined_call_operand.vmem [shape: f32[1,128], index: 6, kind: input, shape index: {}]
  %s7 = inlined_call_operand.vmem [shape: f32[1,128], index: 7, kind: input, shape index: {}]
  %s8 = inlined_call_operand.<no memory space> [shape: f32[1,1], index: 8, kind: input, shape index: {}]
  %s9 = inlined_call_operand.vmem [shape: f32[32,1], index: 9, kind: output, shape index: {}]
  %s10 = sld [smem:[#allocation0]]
  $region50: #{tpu_custom_call.1} parent=0
    _
  %s12 = ssub.s32 1, %s10
  %s13 = scalar_select 0, %s12, %s10
  %v14 = vstv %s8
  %15 = vst [vmem:[#allocation2] sm:$0x1] %v14
  $region1: #{tpu_custom_call.1} parent=0
    #allocation3 [shape = 'u8[393216]{0}', space=vmem, size = 0x60000, scoped, tag = 'input window, operand 5, single buffered']
    #allocation4 [shape = 's32[1]{0}', space=sflag, size = 0x4, scoped, tag = 'scoped memory for tpu_custom_call.1']
    %16 = vsyncpa [#allocation4], 0
    // Predicated region
    $region2: #{tpu_custom_call.1} parent=1 // pred_check
      _
    $region3: #{tpu_custom_call.1} parent=1 // pred_check_branch
      %18 = sbr.rel (0) target = $region5
    $region4: #{tpu_custom_call.1} parent=1 // pred_region
      _
    $region5: #{tpu_custom_call.1} parent=1 // pred_fallthru
      _
    // Predicated region
    $region6: #{tpu_custom_call.1} parent=1 // pred_check
      _
    $region7: #{tpu_custom_call.1} parent=1 // pred_check_branch
      %20 = sbr.rel (0) target = $region9
    $region8: #{tpu_custom_call.1} parent=1 // pred_region
      _
    $region9: #{tpu_custom_call.1} parent=1 // pred_fallthru
      _
    // Predicated region
    $region10: #{tpu_custom_call.1} parent=1 // pred_check
      _
    $region11: #{tpu_custom_call.1} parent=1 // pred_check_branch
      %22 = sbr.rel (0) target = $region13
    $region12: #{tpu_custom_call.1} parent=1 // pred_region
      _
    $region13: #{tpu_custom_call.1} parent=1 // pred_fallthru
      _
    // Predicated region
    $region14: #{tpu_custom_call.1} parent=1 // pred_check
      _
    $region15: #{tpu_custom_call.1} parent=1 // pred_check_branch
      %24 = sbr.rel (0) target = $region17
    $region16: #{tpu_custom_call.1} parent=1 // pred_region
      _
    $region17: #{tpu_custom_call.1} parent=1 // pred_fallthru
      _
    // Predicated region
    $region18: #{tpu_custom_call.1} parent=1 // pred_check
      _
    $region19: #{tpu_custom_call.1} parent=1 // pred_check_branch
      %26 = sbr.rel (0) target = $region21
    $region20: #{tpu_custom_call.1} parent=1 // pred_region
      _
    $region21: #{tpu_custom_call.1} parent=1 // pred_fallthru
      _
    // Predicated region
    $region22: #{tpu_custom_call.1} parent=1 // pred_check
      _
    $region23: #{tpu_custom_call.1} parent=1 // pred_check_branch
      %28 = sbr.rel (0) target = $region25
    $region24: #{tpu_custom_call.1} parent=1 // pred_region
      %s30 = ssub.s32 12288, 12288
      %31 = vsyncadd [#allocation4], %s30
      %s32 = sshll.u32 [#allocation3], 4
      %s33 = int_to_ptr.vmem [resolvable:$true] %s32
      %38 = dma.hbm_to_vmem [thread:$0]  %s5, 12288, %s33, [#allocation4], 64, 64, 4
    $region25: #{tpu_custom_call.1} parent=1 // pred_fallthru
      _
    // Predicated region
    $region26: #{tpu_custom_call.1} parent=1 // pred_check
      _
    $region27: #{tpu_custom_call.1} parent=1 // pred_check_branch
      %40 = sbr.rel (0) target = $region29
    $region28: #{tpu_custom_call.1} parent=1 // pred_region
      _
    $region29: #{tpu_custom_call.1} parent=1 // pred_fallthru
      _
    // Predicated region
    $region30: #{tpu_custom_call.1} parent=1 // pred_check
      _
    $region31: #{tpu_custom_call.1} parent=1 // pred_check_branch
      %42 = sbr.rel (0) target = $region33
    $region32: #{tpu_custom_call.1} parent=1 // pred_region
      _
    $region33: #{tpu_custom_call.1} parent=1 // pred_fallthru
      _
    // Predicated region
    $region34: #{tpu_custom_call.1} parent=1 // pred_check
      _
    $region35: #{tpu_custom_call.1} parent=1 // pred_check_branch
      %44 = sbr.rel (0) target = $region37
    $region36: #{tpu_custom_call.1} parent=1 // pred_region
      _
    $region37: #{tpu_custom_call.1} parent=1 // pred_fallthru
      _
    // Predicated region
    $region38: #{tpu_custom_call.1} parent=1 // pred_check
      _
    $region39: #{tpu_custom_call.1} parent=1 // pred_check_branch
      %46 = sbr.rel (0) target = $region41
    $region40: #{tpu_custom_call.1} parent=1 // pred_region
      %47 = dma.done [#allocation4], 12288
    $region41: #{tpu_custom_call.1} parent=1 // pred_fallthru
      _
    %v49 = vld [vmem:[%s0] sm:$0xf]
    %v50 = vld [vmem:[%s0 + $0x4] sm:$0xf]
    %v51 = vld [vmem:[%s0 + $0x8] sm:$0xf]
    %v52 = vld [vmem:[%s0 + $0xc] sm:$0xf]
    %v53 = vld [vmem:[%s0 + $0x10] sm:$0xf]
    %v54 = vld [vmem:[%s0 + $0x14] sm:$0xf]
    %v55 = vld [vmem:[%s0 + $0x18] sm:$0xf]
    %v56 = vld [vmem:[%s0 + $0x1c] sm:$0xf]
    %v57 = vld [vmem:[%s0 + $0x20] sm:$0xf]
    %v58 = vld [vmem:[%s0 + $0x24] sm:$0xf]
    %v59 = vld [vmem:[%s0 + $0x28] sm:$0xf]
    %v60 = vld [vmem:[%s0 + $0x2c] sm:$0xf]
    %v61 = vld [vmem:[%s0 + $0x30] sm:$0xf]
    %v62 = vld [vmem:[%s0 + $0x34] sm:$0xf]
    %v63 = vld [vmem:[%s0 + $0x38] sm:$0xf]
    %v64 = vld [vmem:[%s0 + $0x3c] sm:$0xf]
    %v65 = vld [vmem:[%s0 + $0x40] sm:$0xf]
    %v66 = vld [vmem:[%s0 + $0x44] sm:$0xf]
    %v67 = vld [vmem:[%s0 + $0x48] sm:$0xf]
    %v68 = vld [vmem:[%s0 + $0x4c] sm:$0xf]
    %v69 = vld [vmem:[%s0 + $0x50] sm:$0xf]
    %v70 = vld [vmem:[%s0 + $0x54] sm:$0xf]
    %v71 = vld [vmem:[%s0 + $0x58] sm:$0xf]
    %v72 = vld [vmem:[%s0 + $0x5c] sm:$0xf]
    %v73 = vld [vmem:[%s0 + $0x60] sm:$0xf]
    %v74 = vld [vmem:[%s0 + $0x64] sm:$0xf]
    %v75 = vld [vmem:[%s0 + $0x68] sm:$0xf]
    %v76 = vld [vmem:[%s0 + $0x6c] sm:$0xf]
    %v77 = vld [vmem:[%s0 + $0x70] sm:$0xf]
    %v78 = vld [vmem:[%s0 + $0x74] sm:$0xf]
    %v79 = vld [vmem:[%s0 + $0x78] sm:$0xf]
    %v80 = vld [vmem:[%s0 + $0x7c] sm:$0xf]
    %v81 = vld [vmem:[%s0 + $0x80] sm:$0xf]
    %v82 = vld [vmem:[%s0 + $0x84] sm:$0xf]
    %v83 = vld [vmem:[%s0 + $0x88] sm:$0xf]
    %v84 = vld [vmem:[%s0 + $0x8c] sm:$0xf]
    %v85 = vld [vmem:[%s0 + $0x90] sm:$0xf]
    %v86 = vld [vmem:[%s0 + $0x94] sm:$0xf]
    %v87 = vld [vmem:[%s0 + $0x98] sm:$0xf]
    %v88 = vld [vmem:[%s0 + $0x9c] sm:$0xf]
    %v89 = vld [vmem:[%s0 + $0xa0] sm:$0xf]
    %v90 = vld [vmem:[%s0 + $0xa4] sm:$0xf]
    %v91 = vld [vmem:[%s0 + $0xa8] sm:$0xf]
    %v92 = vld [vmem:[%s0 + $0xac] sm:$0xf]
    %v93 = vld [vmem:[%s0 + $0xb0] sm:$0xf]
    %v94 = vld [vmem:[%s0 + $0xb4] sm:$0xf]
    %v95 = vld [vmem:[%s0 + $0xb8] sm:$0xf]
    %v96 = vld [vmem:[%s0 + $0xbc] sm:$0xf]
    %v97 = vld [vmem:[%s0 + $0xc0] sm:$0xf]
    %v98 = vld [vmem:[%s0 + $0xc4] sm:$0xf]
    %v99 = vld [vmem:[%s0 + $0xc8] sm:$0xf]
    %v100 = vld [vmem:[%s0 + $0xcc] sm:$0xf]
    %v101 = vld [vmem:[%s0 + $0xd0] sm:$0xf]
    %v102 = vld [vmem:[%s0 + $0xd4] sm:$0xf]
    %v103 = vld [vmem:[%s0 + $0xd8] sm:$0xf]
    %v104 = vld [vmem:[%s0 + $0xdc] sm:$0xf]
    %v105 = vld [vmem:[%s1] sm:$0xf]
    %v106 = vld [vmem:[%s2] sm:$0x1]
    %v108 = vlaneseq
    %v109 = vshrl.u32 %v108, 7
    %v110 = vsub.s32 0, %v109
    %v111 = vrot.slane %v106, %v110
    %v169 = vunpack.c.l.b16 %v49
    %v170 = vunpack.c.l.b16 %v50
    %v171 = vunpack.c.l.b16 %v51
    %v172 = vunpack.c.l.b16 %v52
    %v173 = vunpack.c.l.b16 %v53
    %v174 = vunpack.c.l.b16 %v54
    %v175 = vunpack.c.l.b16 %v55
    %v176 = vunpack.c.l.b16 %v56
    %v177 = vunpack.c.l.b16 %v57
    %v178 = vunpack.c.l.b16 %v58
    %v179 = vunpack.c.l.b16 %v59
    %v180 = vunpack.c.l.b16 %v60
    %v181 = vunpack.c.l.b16 %v61
    %v182 = vunpack.c.l.b16 %v62
    %v183 = vunpack.c.l.b16 %v63
    %v184 = vunpack.c.l.b16 %v64
    %v185 = vunpack.c.l.b16 %v65
    %v186 = vunpack.c.l.b16 %v66
    %v187 = vunpack.c.l.b16 %v67
    %v188 = vunpack.c.l.b16 %v68
    %v189 = vunpack.c.l.b16 %v69
    %v190 = vunpack.c.l.b16 %v70
    %v191 = vunpack.c.l.b16 %v71
    %v192 = vunpack.c.l.b16 %v72
    %v193 = vunpack.c.l.b16 %v73
    %v194 = vunpack.c.l.b16 %v74
    %v195 = vunpack.c.l.b16 %v75
    %v196 = vunpack.c.l.b16 %v76
    %v197 = vunpack.c.l.b16 %v77
    %v198 = vunpack.c.l.b16 %v78
    %v199 = vunpack.c.l.b16 %v79
    %v200 = vunpack.c.l.b16 %v80
    %v201 = vunpack.c.l.b16 %v81
    %v202 = vunpack.c.l.b16 %v82
    %v203 = vunpack.c.l.b16 %v83
    %v204 = vunpack.c.l.b16 %v84
    %v205 = vunpack.c.l.b16 %v85
    %v206 = vunpack.c.l.b16 %v86
    %v207 = vunpack.c.l.b16 %v87
    %v208 = vunpack.c.l.b16 %v88
    %v209 = vunpack.c.l.b16 %v89
    %v210 = vunpack.c.l.b16 %v90
    %v211 = vunpack.c.l.b16 %v91
    %v212 = vunpack.c.l.b16 %v92
    %v213 = vunpack.c.l.b16 %v93
    %v214 = vunpack.c.l.b16 %v94
    %v215 = vunpack.c.l.b16 %v95
    %v216 = vunpack.c.l.b16 %v96
    %v217 = vunpack.c.l.b16 %v97
    %v218 = vunpack.c.l.b16 %v98
    %v219 = vunpack.c.l.b16 %v99
    %v220 = vunpack.c.l.b16 %v100
    %v221 = vunpack.c.l.b16 %v101
    %v222 = vunpack.c.l.b16 %v102
    %v223 = vunpack.c.l.b16 %v103
    %v224 = vunpack.c.l.b16 %v104
    %v225 = vpack.c.b16 %v170, %v169
    %v226 = vpack.c.b16 %v172, %v171
    %v227 = vpack.c.b16 %v174, %v173
    %v228 = vpack.c.b16 %v176, %v175
    %v229 = vpack.c.b16 %v178, %v177
    %v230 = vpack.c.b16 %v180, %v179
    %v231 = vpack.c.b16 %v182, %v181
    %v232 = vpack.c.b16 %v184, %v183
    %v233 = vpack.c.b16 %v186, %v185
    %v234 = vpack.c.b16 %v188, %v187
    %v235 = vpack.c.b16 %v190, %v189
    %v236 = vpack.c.b16 %v192, %v191
    %v237 = vpack.c.b16 %v194, %v193
    %v238 = vpack.c.b16 %v196, %v195
    %v239 = vpack.c.b16 %v198, %v197
    %v240 = vpack.c.b16 %v200, %v199
    %v241 = vpack.c.b16 %v202, %v201
    %v242 = vpack.c.b16 %v204, %v203
    %v243 = vpack.c.b16 %v206, %v205
    %v244 = vpack.c.b16 %v208, %v207
    %v245 = vpack.c.b16 %v210, %v209
    %v246 = vpack.c.b16 %v212, %v211
    %v247 = vpack.c.b16 %v214, %v213
    %v248 = vpack.c.b16 %v216, %v215
    %v249 = vpack.c.b16 %v218, %v217
    %v250 = vpack.c.b16 %v220, %v219
    %v251 = vpack.c.b16 %v222, %v221
    %v252 = vpack.c.b16 %v224, %v223
    %vm253 = vcmask 64512
    %v255 = vsel %vm253, %v225, 0
    %v258 = vsel %vm253, %v226, 0
    %v261 = vsel %vm253, %v227, 0
    %v264 = vsel %vm253, %v228, 0
    %v267 = vsel %vm253, %v229, 0
    %v270 = vsel %vm253, %v230, 0
    %v273 = vsel %vm253, %v231, 0
    %v276 = vsel %vm253, %v232, 0
    %v279 = vsel %vm253, %v233, 0
    %v282 = vsel %vm253, %v234, 0
    %v285 = vsel %vm253, %v235, 0
    %v288 = vsel %vm253, %v236, 0
    %v291 = vsel %vm253, %v237, 0
    %v294 = vsel %vm253, %v238, 0
    %v297 = vsel %vm253, %v239, 0
    %v300 = vsel %vm253, %v240, 0
    %v303 = vsel %vm253, %v241, 0
    %v306 = vsel %vm253, %v242, 0
    %v309 = vsel %vm253, %v243, 0
    %v312 = vsel %vm253, %v244, 0
    %v315 = vsel %vm253, %v245, 0
    %v318 = vsel %vm253, %v246, 0
    %v321 = vsel %vm253, %v247, 0
    %v324 = vsel %vm253, %v248, 0
    %v327 = vsel %vm253, %v249, 0
    %v330 = vsel %vm253, %v250, 0
    %v333 = vsel %vm253, %v251, 0
    %v336 = vsel %vm253, %v252, 0
    %vm338 = vcmask 1043456
    %v340 = vsel %vm338, %v105, 0
    %342 = vmatprep.subr.bf16.mxu0 0
    %343 = vmatpush1.bf16.msra.mxu0 0
    %344 = vmatprep.subr.bf16.mxu0 0
    %345 = vmatpush1.bf16.msra.mxu0 0
    %346 = vmatprep.subr.bf16.mxu0 0
    %347 = vmatpush1.bf16.msra.mxu0 0
    %348 = vmatprep.subr.bf16.mxu0 0
    %349 = vmatpush1.bf16.msra.mxu0 0
    %350 = vmatprep.subr.bf16.mxu0 0
    %351 = vmatpush1.bf16.msra.mxu0 0
    %352 = vmatprep.subr.bf16.mxu0 0
    %353 = vmatpush1.bf16.msra.mxu0 0
    %354 = vmatprep.subr.bf16.mxu0 0
    %355 = vmatpush1.bf16.msra.mxu0 0
    %356 = vmatprep.subr.bf16.mxu0 0
    %357 = vmatpush1.bf16.msra.mxu0 %v340
    %358 = vmatprep.subr.bf16.mxu0 0
    %359 = vmatpush2.bf16.msra.mxu0 0
    %360 = vmatprep.subr.bf16.mxu0 0
    %361 = vmatpush2.bf16.msra.mxu0 0
    %362 = vmatprep.subr.bf16.mxu0 0
    %363 = vmatpush2.bf16.msra.mxu0 0
    %364 = vmatprep.subr.bf16.mxu0 0
    %365 = vmatpush2.bf16.msra.mxu0 0
    %366 = vmatprep.subr.bf16.mxu0 0
    %367 = vmatpush2.bf16.msra.mxu0 0
    %368 = vmatprep.subr.bf16.mxu0 0
    %369 = vmatpush2.bf16.msra.mxu0 0
    %370 = vmatprep.subr.bf16.mxu0 0
    %371 = vmatpush2.bf16.msra.mxu0 0
    %372 = vmatprep.subr.bf16.mxu0 0
    %373 = vmatpush2.bf16.msra.mxu0 0
    %374 = vmatprep.mubr.bf16.mxu0 0
    %375 = vmatmul.mubr.bf16.gmra.mxu0 %v255
    %v376 = vpop.f32.mrf.mxu0
    %v377 = vadd.f32 %v111, %v376
    %v378 = vpop.f32.mrf.mxu0
    %v379 = vpop.f32.mrf.mxu0
    %v380 = vadd.f32 %v111, %v379
    %v381 = vpop.f32.mrf.mxu0
    %382 = vmatprep.mubr.bf16.mxu0 0
    %383 = vmatmul.mubr.bf16.gmra.mxu0 %v258
    %v384 = vpop.f32.mrf.mxu0
    %v385 = vadd.f32 %v111, %v384
    %v386 = vpop.f32.mrf.mxu0
    %v387 = vpop.f32.mrf.mxu0
    %v388 = vadd.f32 %v111, %v387
    %v389 = vpop.f32.mrf.mxu0
    %390 = vmatprep.mubr.bf16.mxu0 0
    %391 = vmatmul.mubr.bf16.gmra.mxu0 %v261
    %v392 = vpop.f32.mrf.mxu0
    %v393 = vadd.f32 %v111, %v392
    %v394 = vpop.f32.mrf.mxu0
    %v395 = vpop.f32.mrf.mxu0
    %v396 = vadd.f32 %v111, %v395
    %v397 = vpop.f32.mrf.mxu0
    %398 = vmatprep.mubr.bf16.mxu0 0
    %399 = vmatmul.mubr.bf16.gmra.mxu0 %v264
    %v400 = vpop.f32.mrf.mxu0
    %v401 = vadd.f32 %v111, %v400
    %v402 = vpop.f32.mrf.mxu0
    %v403 = vpop.f32.mrf.mxu0
    %v404 = vadd.f32 %v111, %v403
    %v405 = vpop.f32.mrf.mxu0
    %406 = vmatprep.mubr.bf16.mxu0 0
    %407 = vmatmul.mubr.bf16.gmra.mxu0 %v267
    %v408 = vpop.f32.mrf.mxu0
    %v409 = vadd.f32 %v111, %v408
    %v410 = vpop.f32.mrf.mxu0
    %v411 = vpop.f32.mrf.mxu0
    %v412 = vadd.f32 %v111, %v411
    %v413 = vpop.f32.mrf.mxu0
    %414 = vmatprep.mubr.bf16.mxu0 0
    %415 = vmatmul.mubr.bf16.gmra.mxu0 %v270
    %v416 = vpop.f32.mrf.mxu0
    %v417 = vadd.f32 %v111, %v416
    %v418 = vpop.f32.mrf.mxu0
    %v419 = vpop.f32.mrf.mxu0
    %v420 = vadd.f32 %v111, %v419
    %v421 = vpop.f32.mrf.mxu0
    %422 = vmatprep.mubr.bf16.mxu0 0
    %423 = vmatmul.mubr.bf16.gmra.mxu0 %v273
    %v424 = vpop.f32.mrf.mxu0
    %v425 = vadd.f32 %v111, %v424
    %v426 = vpop.f32.mrf.mxu0
    %v427 = vpop.f32.mrf.mxu0
    %v428 = vadd.f32 %v111, %v427
    %v429 = vpop.f32.mrf.mxu0
    %430 = vmatprep.mubr.bf16.mxu0 0
    %431 = vmatmul.mubr.bf16.gmra.mxu0 %v276
    %v432 = vpop.f32.mrf.mxu0
    %v433 = vadd.f32 %v111, %v432
    %v434 = vpop.f32.mrf.mxu0
    %v435 = vpop.f32.mrf.mxu0
    %v436 = vadd.f32 %v111, %v435
    %v437 = vpop.f32.mrf.mxu0
    %438 = vmatprep.mubr.bf16.mxu0 0
    %439 = vmatmul.mubr.bf16.gmra.mxu0 %v279
    %v440 = vpop.f32.mrf.mxu0
    %v441 = vadd.f32 %v111, %v440
    %v442 = vpop.f32.mrf.mxu0
    %v443 = vpop.f32.mrf.mxu0
    %v444 = vadd.f32 %v111, %v443
    %v445 = vpop.f32.mrf.mxu0
    %446 = vmatprep.mubr.bf16.mxu0 0
    %447 = vmatmul.mubr.bf16.gmra.mxu0 %v282
    %v448 = vpop.f32.mrf.mxu0
    %v449 = vadd.f32 %v111, %v448
    %v450 = vpop.f32.mrf.mxu0
    %v451 = vpop.f32.mrf.mxu0
    %v452 = vadd.f32 %v111, %v451
    %v453 = vpop.f32.mrf.mxu0
    %454 = vmatprep.mubr.bf16.mxu0 0
    %455 = vmatmul.mubr.bf16.gmra.mxu0 %v285
    %v456 = vpop.f32.mrf.mxu0
    %v457 = vadd.f32 %v111, %v456
    %v458 = vpop.f32.mrf.mxu0
    %v459 = vpop.f32.mrf.mxu0
    %v460 = vadd.f32 %v111, %v459
    %v461 = vpop.f32.mrf.mxu0
    %462 = vmatprep.mubr.bf16.mxu0 0
    %463 = vmatmul.mubr.bf16.gmra.mxu0 %v288
    %v464 = vpop.f32.mrf.mxu0
    %v465 = vadd.f32 %v111, %v464
    %v466 = vpop.f32.mrf.mxu0
    %v467 = vpop.f32.mrf.mxu0
    %v468 = vadd.f32 %v111, %v467
    %v469 = vpop.f32.mrf.mxu0
    %470 = vmatprep.mubr.bf16.mxu0 0
    %471 = vmatmul.mubr.bf16.gmra.mxu0 %v291
    %v472 = vpop.f32.mrf.mxu0
    %v473 = vadd.f32 %v111, %v472
    %v474 = vpop.f32.mrf.mxu0
    %v475 = vpop.f32.mrf.mxu0
    %v476 = vadd.f32 %v111, %v475
    %v477 = vpop.f32.mrf.mxu0
    %478 = vmatprep.mubr.bf16.mxu0 0
    %479 = vmatmul.mubr.bf16.gmra.mxu0 %v294
    %v480 = vpop.f32.mrf.mxu0
    %v481 = vadd.f32 %v111, %v480
    %v482 = vpop.f32.mrf.mxu0
    %v483 = vpop.f32.mrf.mxu0
    %v484 = vadd.f32 %v111, %v483
    %v485 = vpop.f32.mrf.mxu0
    %486 = vmatprep.mubr.bf16.mxu0 0
    %487 = vmatmul.mubr.bf16.gmra.mxu0 %v297
    %v488 = vpop.f32.mrf.mxu0
    %v489 = vadd.f32 %v111, %v488
    %v490 = vpop.f32.mrf.mxu0
    %v491 = vpop.f32.mrf.mxu0
    %v492 = vadd.f32 %v111, %v491
    %v493 = vpop.f32.mrf.mxu0
    %494 = vmatprep.mubr.bf16.mxu0 0
    %495 = vmatmul.mubr.bf16.gmra.mxu0 %v300
    %v496 = vpop.f32.mrf.mxu0
    %v497 = vadd.f32 %v111, %v496
    %v498 = vpop.f32.mrf.mxu0
    %v499 = vpop.f32.mrf.mxu0
    %v500 = vadd.f32 %v111, %v499
    %v501 = vpop.f32.mrf.mxu0
    %502 = vmatprep.mubr.bf16.mxu0 0
    %503 = vmatmul.mubr.bf16.gmra.mxu0 %v303
    %v504 = vpop.f32.mrf.mxu0
    %v505 = vadd.f32 %v111, %v504
    %v506 = vpop.f32.mrf.mxu0
    %v507 = vpop.f32.mrf.mxu0
    %v508 = vadd.f32 %v111, %v507
    %v509 = vpop.f32.mrf.mxu0
    %510 = vmatprep.mubr.bf16.mxu0 0
    %511 = vmatmul.mubr.bf16.gmra.mxu0 %v306
    %v512 = vpop.f32.mrf.mxu0
    %v513 = vadd.f32 %v111, %v512
    %v514 = vpop.f32.mrf.mxu0
    %v515 = vpop.f32.mrf.mxu0
    %v516 = vadd.f32 %v111, %v515
    %v517 = vpop.f32.mrf.mxu0
    %518 = vmatprep.mubr.bf16.mxu0 0
    %519 = vmatmul.mubr.bf16.gmra.mxu0 %v309
    %v520 = vpop.f32.mrf.mxu0
    %v521 = vadd.f32 %v111, %v520
    %v522 = vpop.f32.mrf.mxu0
    %v523 = vpop.f32.mrf.mxu0
    %v524 = vadd.f32 %v111, %v523
    %v525 = vpop.f32.mrf.mxu0
    %526 = vmatprep.mubr.bf16.mxu0 0
    %527 = vmatmul.mubr.bf16.gmra.mxu0 %v312
    %v528 = vpop.f32.mrf.mxu0
    %v529 = vadd.f32 %v111, %v528
    %v530 = vpop.f32.mrf.mxu0
    %v531 = vpop.f32.mrf.mxu0
    %v532 = vadd.f32 %v111, %v531
    %v533 = vpop.f32.mrf.mxu0
    %534 = vmatprep.mubr.bf16.mxu0 0
    %535 = vmatmul.mubr.bf16.gmra.mxu0 %v315
    %v536 = vpop.f32.mrf.mxu0
    %v537 = vadd.f32 %v111, %v536
    %v538 = vpop.f32.mrf.mxu0
    %v539 = vpop.f32.mrf.mxu0
    %v540 = vadd.f32 %v111, %v539
    %v541 = vpop.f32.mrf.mxu0
    %542 = vmatprep.mubr.bf16.mxu0 0
    %543 = vmatmul.mubr.bf16.gmra.mxu0 %v318
    %v544 = vpop.f32.mrf.mxu0
    %v545 = vadd.f32 %v111, %v544
    %v546 = vpop.f32.mrf.mxu0
    %v547 = vpop.f32.mrf.mxu0
    %v548 = vadd.f32 %v111, %v547
    %v549 = vpop.f32.mrf.mxu0
    %550 = vmatprep.mubr.bf16.mxu0 0
    %551 = vmatmul.mubr.bf16.gmra.mxu0 %v321
    %v552 = vpop.f32.mrf.mxu0
    %v553 = vadd.f32 %v111, %v552
    %v554 = vpop.f32.mrf.mxu0
    %v555 = vpop.f32.mrf.mxu0
    %v556 = vadd.f32 %v111, %v555
    %v557 = vpop.f32.mrf.mxu0
    %558 = vmatprep.mubr.bf16.mxu0 0
    %559 = vmatmul.mubr.bf16.gmra.mxu0 %v324
    %v560 = vpop.f32.mrf.mxu0
    %v561 = vadd.f32 %v111, %v560
    %v562 = vpop.f32.mrf.mxu0
    %v563 = vpop.f32.mrf.mxu0
    %v564 = vadd.f32 %v111, %v563
    %v565 = vpop.f32.mrf.mxu0
    %566 = vmatprep.mubr.bf16.mxu0 0
    %567 = vmatmul.mubr.bf16.gmra.mxu0 %v327
    %v568 = vpop.f32.mrf.mxu0
    %v569 = vadd.f32 %v111, %v568
    %v570 = vpop.f32.mrf.mxu0
    %v571 = vpop.f32.mrf.mxu0
    %v572 = vadd.f32 %v111, %v571
    %v573 = vpop.f32.mrf.mxu0
    %574 = vmatprep.mubr.bf16.mxu0 0
    %575 = vmatmul.mubr.bf16.gmra.mxu0 %v330
    %v576 = vpop.f32.mrf.mxu0
    %v577 = vadd.f32 %v111, %v576
    %v578 = vpop.f32.mrf.mxu0
    %v579 = vpop.f32.mrf.mxu0
    %v580 = vadd.f32 %v111, %v579
    %v581 = vpop.f32.mrf.mxu0
    %582 = vmatprep.mubr.bf16.mxu0 0
    %583 = vmatmul.mubr.bf16.gmra.mxu0 %v333
    %v584 = vpop.f32.mrf.mxu0
    %v585 = vadd.f32 %v111, %v584
    %v586 = vpop.f32.mrf.mxu0
    %v587 = vpop.f32.mrf.mxu0
    %v588 = vadd.f32 %v111, %v587
    %v589 = vpop.f32.mrf.mxu0
    %590 = vmatprep.mubr.bf16.mxu0 0
    %591 = vmatmul.mubr.bf16.gmra.mxu0 %v336
    %v592 = vpop.f32.mrf.mxu0
    %v593 = vadd.f32 %v111, %v592
    %v594 = vpop.f32.mrf.mxu0
    %v595 = vpop.f32.mrf.mxu0
    %v596 = vadd.f32 %v111, %v595
    %v597 = vpop.f32.mrf.mxu0
    %598 = vdwg.mxu0
    %v599 = vmax.f32 %v377, 0.0
    %v600 = vmax.f32 %v380, 0.0
    %v601 = vmax.f32 %v385, 0.0
    %v602 = vmax.f32 %v388, 0.0
    %v603 = vmax.f32 %v393, 0.0
    %v604 = vmax.f32 %v396, 0.0
    %v605 = vmax.f32 %v401, 0.0
    %v606 = vmax.f32 %v404, 0.0
    %v607 = vmax.f32 %v409, 0.0
    %v608 = vmax.f32 %v412, 0.0
    %v609 = vmax.f32 %v417, 0.0
    %v610 = vmax.f32 %v420, 0.0
    %v611 = vmax.f32 %v425, 0.0
    %v612 = vmax.f32 %v428, 0.0
    %v613 = vmax.f32 %v433, 0.0
    %v614 = vmax.f32 %v436, 0.0
    %v615 = vmax.f32 %v441, 0.0
    %v616 = vmax.f32 %v444, 0.0
    %v617 = vmax.f32 %v449, 0.0
    %v618 = vmax.f32 %v452, 0.0
    %v619 = vmax.f32 %v457, 0.0
    %v620 = vmax.f32 %v460, 0.0
    %v621 = vmax.f32 %v465, 0.0
    %v622 = vmax.f32 %v468, 0.0
    %v623 = vmax.f32 %v473, 0.0
    %v624 = vmax.f32 %v476, 0.0
    %v625 = vmax.f32 %v481, 0.0
    %v626 = vmax.f32 %v484, 0.0
    %v627 = vmax.f32 %v489, 0.0
    %v628 = vmax.f32 %v492, 0.0
    %v629 = vmax.f32 %v497, 0.0
    %v630 = vmax.f32 %v500, 0.0
    %v631 = vmax.f32 %v505, 0.0
    %v632 = vmax.f32 %v508, 0.0
    %v633 = vmax.f32 %v513, 0.0
    %v634 = vmax.f32 %v516, 0.0
    %v635 = vmax.f32 %v521, 0.0
    %v636 = vmax.f32 %v524, 0.0
    %v637 = vmax.f32 %v529, 0.0
    %v638 = vmax.f32 %v532, 0.0
    %v639 = vmax.f32 %v537, 0.0
    %v640 = vmax.f32 %v540, 0.0
    %v641 = vmax.f32 %v545, 0.0
    %v642 = vmax.f32 %v548, 0.0
    %v643 = vmax.f32 %v553, 0.0
    %v644 = vmax.f32 %v556, 0.0
    %v645 = vmax.f32 %v561, 0.0
    %v646 = vmax.f32 %v564, 0.0
    %v647 = vmax.f32 %v569, 0.0
    %v648 = vmax.f32 %v572, 0.0
    %v649 = vmax.f32 %v577, 0.0
    %v650 = vmax.f32 %v580, 0.0
    %v651 = vmax.f32 %v585, 0.0
    %v652 = vmax.f32 %v588, 0.0
    %v653 = vmax.f32 %v593, 0.0
    %v654 = vmax.f32 %v596, 0.0
    %v655 = vmax.f32 %v599, %v603
    %v656 = vmax.f32 %v600, %v604
    %v657 = vmax.f32 %v601, %v605
    %v658 = vmax.f32 %v602, %v606
    %v659 = vmax.f32 %v603, %v607
    %v660 = vmax.f32 %v604, %v608
    %v661 = vmax.f32 %v605, %v609
    %v662 = vmax.f32 %v606, %v610
    %v663 = vmax.f32 %v607, %v611
    %v664 = vmax.f32 %v608, %v612
    %v665 = vmax.f32 %v609, %v613
    %v666 = vmax.f32 %v610, %v614
    %v667 = vmax.f32 %v611, %v615
    %v668 = vmax.f32 %v612, %v616
    %v669 = vmax.f32 %v613, %v617
    %v670 = vmax.f32 %v614, %v618
    %v671 = vmax.f32 %v615, %v619
    %v672 = vmax.f32 %v616, %v620
    %v673 = vmax.f32 %v617, %v621
    %v674 = vmax.f32 %v618, %v622
    %v675 = vmax.f32 %v619, %v623
    %v676 = vmax.f32 %v620, %v624
    %v677 = vmax.f32 %v621, %v625
    %v678 = vmax.f32 %v622, %v626
    %v679 = vmax.f32 %v623, %v627
    %v680 = vmax.f32 %v624, %v628
    %v681 = vmax.f32 %v625, %v629
    %v682 = vmax.f32 %v626, %v630
    %v683 = vmax.f32 %v627, %v631
    %v684 = vmax.f32 %v628, %v632
    %v685 = vmax.f32 %v629, %v633
    %v686 = vmax.f32 %v630, %v634
    %v687 = vmax.f32 %v631, %v635
    %v688 = vmax.f32 %v632, %v636
    %v689 = vmax.f32 %v633, %v637
    %v690 = vmax.f32 %v634, %v638
    %v691 = vmax.f32 %v635, %v639
    %v692 = vmax.f32 %v636, %v640
    %v693 = vmax.f32 %v637, %v641
    %v694 = vmax.f32 %v638, %v642
    %v695 = vmax.f32 %v639, %v643
    %v696 = vmax.f32 %v640, %v644
    %v697 = vmax.f32 %v641, %v645
    %v698 = vmax.f32 %v642, %v646
    %v699 = vmax.f32 %v643, %v647
    %v700 = vmax.f32 %v644, %v648
    %v701 = vmax.f32 %v645, %v649
    %v702 = vmax.f32 %v646, %v650
    %v703 = vmax.f32 %v647, %v651
    %v704 = vmax.f32 %v648, %v652
    %v705 = vmax.f32 %v649, %v653
    %v706 = vmax.f32 %v650, %v654
    %v707 = vpack.c.bf16 %v656, %v655
    %v708 = vpack.c.bf16 %v658, %v657
    %v709 = vpack.c.bf16 %v660, %v659
    %v710 = vpack.c.bf16 %v662, %v661
    %v711 = vpack.c.bf16 %v664, %v663
    %v712 = vpack.c.bf16 %v666, %v665
    %v713 = vpack.c.bf16 %v668, %v667
    %v714 = vpack.c.bf16 %v670, %v669
    %v715 = vpack.c.bf16 %v672, %v671
    %v716 = vpack.c.bf16 %v674, %v673
    %v717 = vpack.c.bf16 %v676, %v675
    %v718 = vpack.c.bf16 %v678, %v677
    %v719 = vpack.c.bf16 %v680, %v679
    %v720 = vpack.c.bf16 %v682, %v681
    %v721 = vpack.c.bf16 %v684, %v683
    %v722 = vpack.c.bf16 %v686, %v685
    %v723 = vpack.c.bf16 %v688, %v687
    %v724 = vpack.c.bf16 %v690, %v689
    %v725 = vpack.c.bf16 %v692, %v691
    %v726 = vpack.c.bf16 %v694, %v693
    %v727 = vpack.c.bf16 %v696, %v695
    %v728 = vpack.c.bf16 %v698, %v697
    %v729 = vpack.c.bf16 %v700, %v699
    %v730 = vpack.c.bf16 %v702, %v701
    %v731 = vpack.c.bf16 %v704, %v703
    %v732 = vpack.c.bf16 %v706, %v705
    %v733 = vld [vmem:[%s3] sm:$0xf]
    %v734 = vld [vmem:[%s3 + $0x4] sm:$0xf]
    %v735 = vld [vmem:[%s3 + $0x8] sm:$0xf]
    %v736 = vld [vmem:[%s3 + $0xc] sm:$0xf]
    %v737 = vld [vmem:[%s3 + $0x10] sm:$0xf]
    %v738 = vld [vmem:[%s3 + $0x14] sm:$0xf]
    %v739 = vld [vmem:[%s3 + $0x18] sm:$0xf]
    %v740 = vld [vmem:[%s3 + $0x1c] sm:$0xf]
    %v741 = vld [vmem:[%s3 + $0x20] sm:$0xf]
    %v742 = vld [vmem:[%s3 + $0x24] sm:$0xf]
    %v743 = vld [vmem:[%s3 + $0x28] sm:$0xf]
    %v744 = vld [vmem:[%s3 + $0x2c] sm:$0xf]
    %v745 = vld [vmem:[%s3 + $0x30] sm:$0xf]
    %v746 = vld [vmem:[%s3 + $0x34] sm:$0xf]
    %v747 = vld [vmem:[%s3 + $0x38] sm:$0xf]
    %v748 = vld [vmem:[%s3 + $0x3c] sm:$0xf]
    %v749 = vld [vmem:[%s4] sm:$0x1]
    %v751 = vlaneseq
    %v752 = vshrl.u32 %v751, 7
    %v753 = vsub.s32 0, %v752
    %v754 = vrot.slane %v749, %v753
    %v772 = vunpack.c.l.b16 %v733
    %v773 = vunpack.c.l.b16 %v734
    %v774 = vunpack.c.l.b16 %v735
    %v775 = vunpack.c.l.b16 %v736
    %v776 = vunpack.c.l.b16 %v737
    %v777 = vunpack.c.l.b16 %v738
    %v778 = vunpack.c.l.b16 %v739
    %v779 = vunpack.c.l.b16 %v740
    %v780 = vunpack.c.l.b16 %v741
    %v781 = vunpack.c.l.b16 %v742
    %v782 = vunpack.c.l.b16 %v743
    %v783 = vunpack.c.l.b16 %v744
    %v784 = vunpack.c.l.b16 %v745
    %v785 = vunpack.c.l.b16 %v746
    %v786 = vunpack.c.l.b16 %v747
    %v787 = vunpack.c.l.b16 %v748
    %v788 = vpack.c.b16 %v773, %v772
    %v789 = vpack.c.b16 %v775, %v774
    %v790 = vpack.c.b16 %v777, %v776
    %v791 = vpack.c.b16 %v779, %v778
    %v792 = vpack.c.b16 %v781, %v780
    %v793 = vpack.c.b16 %v783, %v782
    %v794 = vpack.c.b16 %v785, %v784
    %v795 = vpack.c.b16 %v787, %v786
    %804 = vmatprep.subr.bf16.mxu0 0
    %805 = vmatpush1.bf16.msra.mxu0 %v795
    %806 = vmatprep.subr.bf16.mxu0 0
    %807 = vmatpush1.bf16.msra.mxu0 %v794
    %808 = vmatprep.subr.bf16.mxu0 0
    %809 = vmatpush1.bf16.msra.mxu0 %v793
    %810 = vmatprep.subr.bf16.mxu0 0
    %811 = vmatpush1.bf16.msra.mxu0 %v792
    %812 = vmatprep.subr.bf16.mxu0 0
    %813 = vmatpush1.bf16.msra.mxu0 %v791
    %814 = vmatprep.subr.bf16.mxu0 0
    %815 = vmatpush1.bf16.msra.mxu0 %v790
    %816 = vmatprep.subr.bf16.mxu0 0
    %817 = vmatpush1.bf16.msra.mxu0 %v789
    %818 = vmatprep.subr.bf16.mxu0 0
    %819 = vmatpush1.bf16.msra.mxu0 %v788
    %820 = vmatprep.subr.bf16.mxu0 0
    %821 = vmatpush2.bf16.msra.mxu0 0
    %822 = vmatprep.subr.bf16.mxu0 0
    %823 = vmatpush2.bf16.msra.mxu0 0
    %824 = vmatprep.subr.bf16.mxu0 0
    %825 = vmatpush2.bf16.msra.mxu0 0
    %826 = vmatprep.subr.bf16.mxu0 0
    %827 = vmatpush2.bf16.msra.mxu0 0
    %828 = vmatprep.subr.bf16.mxu0 0
    %829 = vmatpush2.bf16.msra.mxu0 0
    %830 = vmatprep.subr.bf16.mxu0 0
    %831 = vmatpush2.bf16.msra.mxu0 0
    %832 = vmatprep.subr.bf16.mxu0 0
    %833 = vmatpush2.bf16.msra.mxu0 0
    %834 = vmatprep.subr.bf16.mxu0 0
    %835 = vmatpush2.bf16.msra.mxu0 0
    %836 = vmatprep.mubr.bf16.mxu0 0
    %837 = vmatmul.mubr.bf16.gmra.mxu0 %v707
    %v838 = vpop.f32.mrf.mxu0
    %v839 = vadd.f32 %v754, %v838
    %v840 = vpop.f32.mrf.mxu0
    %v841 = vpop.f32.mrf.mxu0
    %v842 = vadd.f32 %v754, %v841
    %v843 = vpop.f32.mrf.mxu0
    %844 = vmatprep.mubr.bf16.mxu0 0
    %845 = vmatmul.mubr.bf16.gmra.mxu0 %v708
    %v846 = vpop.f32.mrf.mxu0
    %v847 = vadd.f32 %v754, %v846
    %v848 = vpop.f32.mrf.mxu0
    %v849 = vpop.f32.mrf.mxu0
    %v850 = vadd.f32 %v754, %v849
    %v851 = vpop.f32.mrf.mxu0
    %852 = vmatprep.mubr.bf16.mxu0 0
    %853 = vmatmul.mubr.bf16.gmra.mxu0 %v709
    %v854 = vpop.f32.mrf.mxu0
    %v855 = vadd.f32 %v754, %v854
    %v856 = vpop.f32.mrf.mxu0
    %v857 = vpop.f32.mrf.mxu0
    %v858 = vadd.f32 %v754, %v857
    %v859 = vpop.f32.mrf.mxu0
    %860 = vmatprep.mubr.bf16.mxu0 0
    %861 = vmatmul.mubr.bf16.gmra.mxu0 %v710
    %v862 = vpop.f32.mrf.mxu0
    %v863 = vadd.f32 %v754, %v862
    %v864 = vpop.f32.mrf.mxu0
    %v865 = vpop.f32.mrf.mxu0
    %v866 = vadd.f32 %v754, %v865
    %v867 = vpop.f32.mrf.mxu0
    %868 = vmatprep.mubr.bf16.mxu0 0
    %869 = vmatmul.mubr.bf16.gmra.mxu0 %v711
    %v870 = vpop.f32.mrf.mxu0
    %v871 = vadd.f32 %v754, %v870
    %v872 = vpop.f32.mrf.mxu0
    %v873 = vpop.f32.mrf.mxu0
    %v874 = vadd.f32 %v754, %v873
    %v875 = vpop.f32.mrf.mxu0
    %876 = vmatprep.mubr.bf16.mxu0 0
    %877 = vmatmul.mubr.bf16.gmra.mxu0 %v712
    %v878 = vpop.f32.mrf.mxu0
    %v879 = vadd.f32 %v754, %v878
    %v880 = vpop.f32.mrf.mxu0
    %v881 = vpop.f32.mrf.mxu0
    %v882 = vadd.f32 %v754, %v881
    %v883 = vpop.f32.mrf.mxu0
    %884 = vmatprep.mubr.bf16.mxu0 0
    %885 = vmatmul.mubr.bf16.gmra.mxu0 %v713
    %v886 = vpop.f32.mrf.mxu0
    %v887 = vadd.f32 %v754, %v886
    %v888 = vpop.f32.mrf.mxu0
    %v889 = vpop.f32.mrf.mxu0
    %v890 = vadd.f32 %v754, %v889
    %v891 = vpop.f32.mrf.mxu0
    %892 = vmatprep.mubr.bf16.mxu0 0
    %893 = vmatmul.mubr.bf16.gmra.mxu0 %v714
    %v894 = vpop.f32.mrf.mxu0
    %v895 = vadd.f32 %v754, %v894
    %v896 = vpop.f32.mrf.mxu0
    %v897 = vpop.f32.mrf.mxu0
    %v898 = vadd.f32 %v754, %v897
    %v899 = vpop.f32.mrf.mxu0
    %900 = vmatprep.mubr.bf16.mxu0 0
    %901 = vmatmul.mubr.bf16.gmra.mxu0 %v715
    %v902 = vpop.f32.mrf.mxu0
    %v903 = vadd.f32 %v754, %v902
    %v904 = vpop.f32.mrf.mxu0
    %v905 = vpop.f32.mrf.mxu0
    %v906 = vadd.f32 %v754, %v905
    %v907 = vpop.f32.mrf.mxu0
    %908 = vmatprep.mubr.bf16.mxu0 0
    %909 = vmatmul.mubr.bf16.gmra.mxu0 %v716
    %v910 = vpop.f32.mrf.mxu0
    %v911 = vadd.f32 %v754, %v910
    %v912 = vpop.f32.mrf.mxu0
    %v913 = vpop.f32.mrf.mxu0
    %v914 = vadd.f32 %v754, %v913
    %v915 = vpop.f32.mrf.mxu0
    %916 = vmatprep.mubr.bf16.mxu0 0
    %917 = vmatmul.mubr.bf16.gmra.mxu0 %v717
    %v918 = vpop.f32.mrf.mxu0
    %v919 = vadd.f32 %v754, %v918
    %v920 = vpop.f32.mrf.mxu0
    %v921 = vpop.f32.mrf.mxu0
    %v922 = vadd.f32 %v754, %v921
    %v923 = vpop.f32.mrf.mxu0
    %924 = vmatprep.mubr.bf16.mxu0 0
    %925 = vmatmul.mubr.bf16.gmra.mxu0 %v718
    %v926 = vpop.f32.mrf.mxu0
    %v927 = vadd.f32 %v754, %v926
    %v928 = vpop.f32.mrf.mxu0
    %v929 = vpop.f32.mrf.mxu0
    %v930 = vadd.f32 %v754, %v929
    %v931 = vpop.f32.mrf.mxu0
    %932 = vmatprep.mubr.bf16.mxu0 0
    %933 = vmatmul.mubr.bf16.gmra.mxu0 %v719
    %v934 = vpop.f32.mrf.mxu0
    %v935 = vadd.f32 %v754, %v934
    %v936 = vpop.f32.mrf.mxu0
    %v937 = vpop.f32.mrf.mxu0
    %v938 = vadd.f32 %v754, %v937
    %v939 = vpop.f32.mrf.mxu0
    %940 = vmatprep.mubr.bf16.mxu0 0
    %941 = vmatmul.mubr.bf16.gmra.mxu0 %v720
    %v942 = vpop.f32.mrf.mxu0
    %v943 = vadd.f32 %v754, %v942
    %v944 = vpop.f32.mrf.mxu0
    %v945 = vpop.f32.mrf.mxu0
    %v946 = vadd.f32 %v754, %v945
    %v947 = vpop.f32.mrf.mxu0
    %948 = vmatprep.mubr.bf16.mxu0 0
    %949 = vmatmul.mubr.bf16.gmra.mxu0 %v721
    %v950 = vpop.f32.mrf.mxu0
    %v951 = vadd.f32 %v754, %v950
    %v952 = vpop.f32.mrf.mxu0
    %v953 = vpop.f32.mrf.mxu0
    %v954 = vadd.f32 %v754, %v953
    %v955 = vpop.f32.mrf.mxu0
    %956 = vmatprep.mubr.bf16.mxu0 0
    %957 = vmatmul.mubr.bf16.gmra.mxu0 %v722
    %v958 = vpop.f32.mrf.mxu0
    %v959 = vadd.f32 %v754, %v958
    %v960 = vpop.f32.mrf.mxu0
    %v961 = vpop.f32.mrf.mxu0
    %v962 = vadd.f32 %v754, %v961
    %v963 = vpop.f32.mrf.mxu0
    %964 = vmatprep.mubr.bf16.mxu0 0
    %965 = vmatmul.mubr.bf16.gmra.mxu0 %v723
    %v966 = vpop.f32.mrf.mxu0
    %v967 = vadd.f32 %v754, %v966
    %v968 = vpop.f32.mrf.mxu0
    %v969 = vpop.f32.mrf.mxu0
    %v970 = vadd.f32 %v754, %v969
    %v971 = vpop.f32.mrf.mxu0
    %972 = vmatprep.mubr.bf16.mxu0 0
    %973 = vmatmul.mubr.bf16.gmra.mxu0 %v724
    %v974 = vpop.f32.mrf.mxu0
    %v975 = vadd.f32 %v754, %v974
    %v976 = vpop.f32.mrf.mxu0
    %v977 = vpop.f32.mrf.mxu0
    %v978 = vadd.f32 %v754, %v977
    %v979 = vpop.f32.mrf.mxu0
    %980 = vmatprep.mubr.bf16.mxu0 0
    %981 = vmatmul.mubr.bf16.gmra.mxu0 %v725
    %v982 = vpop.f32.mrf.mxu0
    %v983 = vadd.f32 %v754, %v982
    %v984 = vpop.f32.mrf.mxu0
    %v985 = vpop.f32.mrf.mxu0
    %v986 = vadd.f32 %v754, %v985
    %v987 = vpop.f32.mrf.mxu0
    %988 = vmatprep.mubr.bf16.mxu0 0
    %989 = vmatmul.mubr.bf16.gmra.mxu0 %v726
    %v990 = vpop.f32.mrf.mxu0
    %v991 = vadd.f32 %v754, %v990
    %v992 = vpop.f32.mrf.mxu0
    %v993 = vpop.f32.mrf.mxu0
    %v994 = vadd.f32 %v754, %v993
    %v995 = vpop.f32.mrf.mxu0
    %996 = vmatprep.mubr.bf16.mxu0 0
    %997 = vmatmul.mubr.bf16.gmra.mxu0 %v727
    %v998 = vpop.f32.mrf.mxu0
    %v999 = vadd.f32 %v754, %v998
    %v1000 = vpop.f32.mrf.mxu0
    %v1001 = vpop.f32.mrf.mxu0
    %v1002 = vadd.f32 %v754, %v1001
    %v1003 = vpop.f32.mrf.mxu0
    %1004 = vmatprep.mubr.bf16.mxu0 0
    %1005 = vmatmul.mubr.bf16.gmra.mxu0 %v728
    %v1006 = vpop.f32.mrf.mxu0
    %v1007 = vadd.f32 %v754, %v1006
    %v1008 = vpop.f32.mrf.mxu0
    %v1009 = vpop.f32.mrf.mxu0
    %v1010 = vadd.f32 %v754, %v1009
    %v1011 = vpop.f32.mrf.mxu0
    %1012 = vmatprep.mubr.bf16.mxu0 0
    %1013 = vmatmul.mubr.bf16.gmra.mxu0 %v729
    %v1014 = vpop.f32.mrf.mxu0
    %v1015 = vadd.f32 %v754, %v1014
    %v1016 = vpop.f32.mrf.mxu0
    %v1017 = vpop.f32.mrf.mxu0
    %v1018 = vadd.f32 %v754, %v1017
    %v1019 = vpop.f32.mrf.mxu0
    %1020 = vmatprep.mubr.bf16.mxu0 0
    %1021 = vmatmul.mubr.bf16.gmra.mxu0 %v730
    %v1022 = vpop.f32.mrf.mxu0
    %v1023 = vadd.f32 %v754, %v1022
    %v1024 = vpop.f32.mrf.mxu0
    %v1025 = vpop.f32.mrf.mxu0
    %v1026 = vadd.f32 %v754, %v1025
    %v1027 = vpop.f32.mrf.mxu0
    %1028 = vmatprep.mubr.bf16.mxu0 0
    %1029 = vmatmul.mubr.bf16.gmra.mxu0 %v731
    %v1030 = vpop.f32.mrf.mxu0
    %v1031 = vadd.f32 %v754, %v1030
    %v1032 = vpop.f32.mrf.mxu0
    %v1033 = vpop.f32.mrf.mxu0
    %v1034 = vadd.f32 %v754, %v1033
    %v1035 = vpop.f32.mrf.mxu0
    %1036 = vmatprep.mubr.bf16.mxu0 0
    %1037 = vmatmul.mubr.bf16.gmra.mxu0 %v732
    %v1038 = vpop.f32.mrf.mxu0
    %v1039 = vadd.f32 %v754, %v1038
    %v1040 = vpop.f32.mrf.mxu0
    %v1041 = vpop.f32.mrf.mxu0
    %v1042 = vadd.f32 %v754, %v1041
    %v1043 = vpop.f32.mrf.mxu0
    %1044 = vdwg.mxu0
    %v1045 = vmax.f32 %v839, 0.0
    %v1046 = vmax.f32 %v842, 0.0
    %v1047 = vmax.f32 %v847, 0.0
    %v1048 = vmax.f32 %v850, 0.0
    %v1049 = vmax.f32 %v855, 0.0
    %v1050 = vmax.f32 %v858, 0.0
    %v1051 = vmax.f32 %v863, 0.0
    %v1052 = vmax.f32 %v866, 0.0
    %v1053 = vmax.f32 %v871, 0.0
    %v1054 = vmax.f32 %v874, 0.0
    %v1055 = vmax.f32 %v879, 0.0
    %v1056 = vmax.f32 %v882, 0.0
    %v1057 = vmax.f32 %v887, 0.0
    %v1058 = vmax.f32 %v890, 0.0
    %v1059 = vmax.f32 %v895, 0.0
    %v1060 = vmax.f32 %v898, 0.0
    %v1061 = vmax.f32 %v903, 0.0
    %v1062 = vmax.f32 %v906, 0.0
    %v1063 = vmax.f32 %v911, 0.0
    %v1064 = vmax.f32 %v914, 0.0
    %v1065 = vmax.f32 %v919, 0.0
    %v1066 = vmax.f32 %v922, 0.0
    %v1067 = vmax.f32 %v927, 0.0
    %v1068 = vmax.f32 %v930, 0.0
    %v1069 = vmax.f32 %v935, 0.0
    %v1070 = vmax.f32 %v938, 0.0
    %v1071 = vmax.f32 %v943, 0.0
    %v1072 = vmax.f32 %v946, 0.0
    %v1073 = vmax.f32 %v951, 0.0
    %v1074 = vmax.f32 %v954, 0.0
    %v1075 = vmax.f32 %v959, 0.0
    %v1076 = vmax.f32 %v962, 0.0
    %v1077 = vmax.f32 %v967, 0.0
    %v1078 = vmax.f32 %v970, 0.0
    %v1079 = vmax.f32 %v975, 0.0
    %v1080 = vmax.f32 %v978, 0.0
    %v1081 = vmax.f32 %v983, 0.0
    %v1082 = vmax.f32 %v986, 0.0
    %v1083 = vmax.f32 %v991, 0.0
    %v1084 = vmax.f32 %v994, 0.0
    %v1085 = vmax.f32 %v999, 0.0
    %v1086 = vmax.f32 %v1002, 0.0
    %v1087 = vmax.f32 %v1007, 0.0
    %v1088 = vmax.f32 %v1010, 0.0
    %v1089 = vmax.f32 %v1015, 0.0
    %v1090 = vmax.f32 %v1018, 0.0
    %v1091 = vmax.f32 %v1023, 0.0
    %v1092 = vmax.f32 %v1026, 0.0
    %v1093 = vmax.f32 %v1031, 0.0
    %v1094 = vmax.f32 %v1034, 0.0
    %v1095 = vmax.f32 %v1039, 0.0
    %v1096 = vmax.f32 %v1042, 0.0
    %v1097 = vmax.f32 %v1045, %v1049
    %v1098 = vmax.f32 %v1046, %v1050
    %v1099 = vmax.f32 %v1047, %v1051
    %v1100 = vmax.f32 %v1048, %v1052
    %v1101 = vmax.f32 %v1049, %v1053
    %v1102 = vmax.f32 %v1050, %v1054
    %v1103 = vmax.f32 %v1051, %v1055
    %v1104 = vmax.f32 %v1052, %v1056
    %v1105 = vmax.f32 %v1053, %v1057
    %v1106 = vmax.f32 %v1054, %v1058
    %v1107 = vmax.f32 %v1055, %v1059
    %v1108 = vmax.f32 %v1056, %v1060
    %v1109 = vmax.f32 %v1057, %v1061
    %v1110 = vmax.f32 %v1058, %v1062
    %v1111 = vmax.f32 %v1059, %v1063
    %v1112 = vmax.f32 %v1060, %v1064
    %v1113 = vmax.f32 %v1061, %v1065
    %v1114 = vmax.f32 %v1062, %v1066
    %v1115 = vmax.f32 %v1063, %v1067
    %v1116 = vmax.f32 %v1064, %v1068
    %v1117 = vmax.f32 %v1065, %v1069
    %v1118 = vmax.f32 %v1066, %v1070
    %v1119 = vmax.f32 %v1067, %v1071
    %v1120 = vmax.f32 %v1068, %v1072
    %v1121 = vmax.f32 %v1069, %v1073
    %v1122 = vmax.f32 %v1070, %v1074
    %v1123 = vmax.f32 %v1071, %v1075
    %v1124 = vmax.f32 %v1072, %v1076
    %v1125 = vmax.f32 %v1073, %v1077
    %v1126 = vmax.f32 %v1074, %v1078
    %v1127 = vmax.f32 %v1075, %v1079
    %v1128 = vmax.f32 %v1076, %v1080
    %v1129 = vmax.f32 %v1077, %v1081
    %v1130 = vmax.f32 %v1078, %v1082
    %v1131 = vmax.f32 %v1079, %v1083
    %v1132 = vmax.f32 %v1080, %v1084
    %v1133 = vmax.f32 %v1081, %v1085
    %v1134 = vmax.f32 %v1082, %v1086
    %v1135 = vmax.f32 %v1083, %v1087
    %v1136 = vmax.f32 %v1084, %v1088
    %v1137 = vmax.f32 %v1085, %v1089
    %v1138 = vmax.f32 %v1086, %v1090
    %v1139 = vmax.f32 %v1087, %v1091
    %v1140 = vmax.f32 %v1088, %v1092
    %v1141 = vmax.f32 %v1089, %v1093
    %v1142 = vmax.f32 %v1090, %v1094
    %v1143 = vmax.f32 %v1091, %v1095
    %v1144 = vmax.f32 %v1092, %v1096
    %v1145 = vpack.c.bf16 %v1098, %v1097
    %v1146 = vpack.c.bf16 %v1100, %v1099
    %v1147 = vpack.c.bf16 %v1102, %v1101
    %v1148 = vpack.c.bf16 %v1104, %v1103
    %v1149 = vpack.c.bf16 %v1106, %v1105
    %v1150 = vpack.c.bf16 %v1108, %v1107
    %v1151 = vpack.c.bf16 %v1110, %v1109
    %v1152 = vpack.c.bf16 %v1112, %v1111
    %v1153 = vpack.c.bf16 %v1114, %v1113
    %v1154 = vpack.c.bf16 %v1116, %v1115
    %v1155 = vpack.c.bf16 %v1118, %v1117
    %v1156 = vpack.c.bf16 %v1120, %v1119
    %v1157 = vpack.c.bf16 %v1122, %v1121
    %v1158 = vpack.c.bf16 %v1124, %v1123
    %v1159 = vpack.c.bf16 %v1126, %v1125
    %v1160 = vpack.c.bf16 %v1128, %v1127
    %v1161 = vpack.c.bf16 %v1130, %v1129
    %v1162 = vpack.c.bf16 %v1132, %v1131
    %v1163 = vpack.c.bf16 %v1134, %v1133
    %v1164 = vpack.c.bf16 %v1136, %v1135
    %v1165 = vpack.c.bf16 %v1138, %v1137
    %v1166 = vpack.c.bf16 %v1140, %v1139
    %v1167 = vpack.c.bf16 %v1142, %v1141
    %v1168 = vpack.c.bf16 %v1144, %v1143
    %v1169 = vld [vmem:[#allocation3] sm:$0xf]
    %v1170 = vld [vmem:[#allocation3 + $0x4] sm:$0xf]
    %v1171 = vld [vmem:[#allocation3 + $0x8] sm:$0xf]
    %v1172 = vld [vmem:[#allocation3 + $0xc] sm:$0xf]
    %v1173 = vld [vmem:[#allocation3 + $0x10] sm:$0xf]
    %v1174 = vld [vmem:[#allocation3 + $0x14] sm:$0xf]
    %v1175 = vld [vmem:[#allocation3 + $0x18] sm:$0xf]
    %v1176 = vld [vmem:[#allocation3 + $0x1c] sm:$0xf]
    %v1177 = vld [vmem:[#allocation3 + $0x20] sm:$0xf]
    %v1178 = vld [vmem:[#allocation3 + $0x24] sm:$0xf]
    %v1179 = vld [vmem:[#allocation3 + $0x28] sm:$0xf]
    %v1180 = vld [vmem:[#allocation3 + $0x2c] sm:$0xf]
    %v1181 = vld [vmem:[#allocation3 + $0x30] sm:$0xf]
    %v1182 = vld [vmem:[#allocation3 + $0x34] sm:$0xf]
    %v1183 = vld [vmem:[#allocation3 + $0x38] sm:$0xf]
    %v1184 = vld [vmem:[#allocation3 + $0x3c] sm:$0xf]
    %s1185 = scalar_lea.vmem [#allocation3], 64
    %v1186 = vld [vmem:[%s1185] sm:$0xf]
    %v1187 = vld [vmem:[%s1185 + $0x4] sm:$0xf]
    %v1188 = vld [vmem:[%s1185 + $0x8] sm:$0xf]
    %v1189 = vld [vmem:[%s1185 + $0xc] sm:$0xf]
    %v1190 = vld [vmem:[%s1185 + $0x10] sm:$0xf]
    %v1191 = vld [vmem:[%s1185 + $0x14] sm:$0xf]
    %v1192 = vld [vmem:[%s1185 + $0x18] sm:$0xf]
    %v1193 = vld [vmem:[%s1185 + $0x1c] sm:$0xf]
    %v1194 = vld [vmem:[%s1185 + $0x20] sm:$0xf]
    %v1195 = vld [vmem:[%s1185 + $0x24] sm:$0xf]
    %v1196 = vld [vmem:[%s1185 + $0x28] sm:$0xf]
    %v1197 = vld [vmem:[%s1185 + $0x2c] sm:$0xf]
    %v1198 = vld [vmem:[%s1185 + $0x30] sm:$0xf]
    %v1199 = vld [vmem:[%s1185 + $0x34] sm:$0xf]
    %v1200 = vld [vmem:[%s1185 + $0x38] sm:$0xf]
    %v1201 = vld [vmem:[%s1185 + $0x3c] sm:$0xf]
    %v1218 = vunpack.c.l.b16 %v1186
    %v1219 = vunpack.c.l.b16 %v1187
    %v1220 = vunpack.c.l.b16 %v1188
    %v1221 = vunpack.c.l.b16 %v1189
    %v1222 = vunpack.c.l.b16 %v1190
    %v1223 = vunpack.c.l.b16 %v1191
    %v1224 = vunpack.c.l.b16 %v1192
    %v1225 = vunpack.c.l.b16 %v1193
    %v1226 = vunpack.c.l.b16 %v1194
    %v1227 = vunpack.c.l.b16 %v1195
    %v1228 = vunpack.c.l.b16 %v1196
    %v1229 = vunpack.c.l.b16 %v1197
    %v1230 = vunpack.c.l.b16 %v1198
    %v1231 = vunpack.c.l.b16 %v1199
    %v1232 = vunpack.c.l.b16 %v1200
    %v1233 = vunpack.c.l.b16 %v1201
    %v1234 = vpack.c.b16 %v1219, %v1218
    %v1235 = vpack.c.b16 %v1221, %v1220
    %v1236 = vpack.c.b16 %v1223, %v1222
    %v1237 = vpack.c.b16 %v1225, %v1224
    %v1238 = vpack.c.b16 %v1227, %v1226
    %v1239 = vpack.c.b16 %v1229, %v1228
    %v1240 = vpack.c.b16 %v1231, %v1230
    %v1241 = vpack.c.b16 %v1233, %v1232
    %1250 = vmatprep.subr.bf16.mxu0 0
    %1251 = vmatpush1.bf16.msra.mxu0 %v1241
    %1252 = vmatprep.subr.bf16.mxu0 0
    %1253 = vmatpush1.bf16.msra.mxu0 %v1240
    %1254 = vmatprep.subr.bf16.mxu0 0
    %1255 = vmatpush1.bf16.msra.mxu0 %v1239
    %1256 = vmatprep.subr.bf16.mxu0 0
    %1257 = vmatpush1.bf16.msra.mxu0 %v1238
    %1258 = vmatprep.subr.bf16.mxu0 0
    %1259 = vmatpush1.bf16.msra.mxu0 %v1237
    %1260 = vmatprep.subr.bf16.mxu0 0
    %1261 = vmatpush1.bf16.msra.mxu0 %v1236
    %1262 = vmatprep.subr.bf16.mxu0 0
    %1263 = vmatpush1.bf16.msra.mxu0 %v1235
    %1264 = vmatprep.subr.bf16.mxu0 0
    %1265 = vmatpush1.bf16.msra.mxu0 %v1234
    %1266 = vmatprep.subr.bf16.mxu0 0
    %1267 = vmatpush2.bf16.msra.mxu0 0
    %1268 = vmatprep.subr.bf16.mxu0 0
    %1269 = vmatpush2.bf16.msra.mxu0 0
    %1270 = vmatprep.subr.bf16.mxu0 0
    %1271 = vmatpush2.bf16.msra.mxu0 0
    %1272 = vmatprep.subr.bf16.mxu0 0
    %1273 = vmatpush2.bf16.msra.mxu0 0
    %1274 = vmatprep.subr.bf16.mxu0 0
    %1275 = vmatpush2.bf16.msra.mxu0 0
    %1276 = vmatprep.subr.bf16.mxu0 0
    %1277 = vmatpush2.bf16.msra.mxu0 0
    %1278 = vmatprep.subr.bf16.mxu0 0
    %1279 = vmatpush2.bf16.msra.mxu0 0
    %1280 = vmatprep.subr.bf16.mxu0 0
    %1281 = vmatpush2.bf16.msra.mxu0 0
    %1282 = vmatprep.mubr.bf16.mxu0 0
    %1283 = vmatmul.mubr.bf16.gmra.mxu0 %v1147
    %v1284 = vpop.f32.mrf.mxu0
    %v1285 = vadd.f32 0.0, %v1284
    %v1286 = vpop.f32.mrf.mxu0
    %v1287 = vpop.f32.mrf.mxu0
    %v1288 = vadd.f32 0.0, %v1287
    %v1289 = vpop.f32.mrf.mxu0
    %1290 = vmatprep.mubr.bf16.mxu0 0
    %1291 = vmatmul.mubr.bf16.gmra.mxu0 %v1148
    %v1292 = vpop.f32.mrf.mxu0
    %v1293 = vadd.f32 0.0, %v1292
    %v1294 = vpop.f32.mrf.mxu0
    %v1295 = vpop.f32.mrf.mxu0
    %v1296 = vadd.f32 0.0, %v1295
    %v1297 = vpop.f32.mrf.mxu0
    %1298 = vdwg.mxu0
    %v1315 = vunpack.c.l.b16 %v1169
    %v1316 = vunpack.c.l.b16 %v1170
    %v1317 = vunpack.c.l.b16 %v1171
    %v1318 = vunpack.c.l.b16 %v1172
    %v1319 = vunpack.c.l.b16 %v1173
    %v1320 = vunpack.c.l.b16 %v1174
    %v1321 = vunpack.c.l.b16 %v1175
    %v1322 = vunpack.c.l.b16 %v1176
    %v1323 = vunpack.c.l.b16 %v1177
    %v1324 = vunpack.c.l.b16 %v1178
    %v1325 = vunpack.c.l.b16 %v1179
    %v1326 = vunpack.c.l.b16 %v1180
    %v1327 = vunpack.c.l.b16 %v1181
    %v1328 = vunpack.c.l.b16 %v1182
    %v1329 = vunpack.c.l.b16 %v1183
    %v1330 = vunpack.c.l.b16 %v1184
    %v1331 = vpack.c.b16 %v1316, %v1315
    %v1332 = vpack.c.b16 %v1318, %v1317
    %v1333 = vpack.c.b16 %v1320, %v1319
    %v1334 = vpack.c.b16 %v1322, %v1321
    %v1335 = vpack.c.b16 %v1324, %v1323
    %v1336 = vpack.c.b16 %v1326, %v1325
    %v1337 = vpack.c.b16 %v1328, %v1327
    %v1338 = vpack.c.b16 %v1330, %v1329
    %1347 = vmatprep.subr.bf16.mxu0 0
    %1348 = vmatpush1.bf16.msra.mxu0 %v1338
    %1349 = vmatprep.subr.bf16.mxu0 0
    %1350 = vmatpush1.bf16.msra.mxu0 %v1337
    %1351 = vmatprep.subr.bf16.mxu0 0
    %1352 = vmatpush1.bf16.msra.mxu0 %v1336
    %1353 = vmatprep.subr.bf16.mxu0 0
    %1354 = vmatpush1.bf16.msra.mxu0 %v1335
    %1355 = vmatprep.subr.bf16.mxu0 0
    %1356 = vmatpush1.bf16.msra.mxu0 %v1334
    %1357 = vmatprep.subr.bf16.mxu0 0
    %1358 = vmatpush1.bf16.msra.mxu0 %v1333
    %1359 = vmatprep.subr.bf16.mxu0 0
    %1360 = vmatpush1.bf16.msra.mxu0 %v1332
    %1361 = vmatprep.subr.bf16.mxu0 0
    %1362 = vmatpush1.bf16.msra.mxu0 %v1331
    %1363 = vmatprep.subr.bf16.mxu0 0
    %1364 = vmatpush2.bf16.msra.mxu0 0
    %1365 = vmatprep.subr.bf16.mxu0 0
    %1366 = vmatpush2.bf16.msra.mxu0 0
    %1367 = vmatprep.subr.bf16.mxu0 0
    %1368 = vmatpush2.bf16.msra.mxu0 0
    %1369 = vmatprep.subr.bf16.mxu0 0
    %1370 = vmatpush2.bf16.msra.mxu0 0
    %1371 = vmatprep.subr.bf16.mxu0 0
    %1372 = vmatpush2.bf16.msra.mxu0 0
    %1373 = vmatprep.subr.bf16.mxu0 0
    %1374 = vmatpush2.bf16.msra.mxu0 0
    %1375 = vmatprep.subr.bf16.mxu0 0
    %1376 = vmatpush2.bf16.msra.mxu0 0
    %1377 = vmatprep.subr.bf16.mxu0 0
    %1378 = vmatpush2.bf16.msra.mxu0 0
    %1379 = vmatprep.mubr.bf16.mxu0 0
    %1380 = vmatmul.mubr.bf16.gmra.mxu0 %v1145
    %v1381 = vpop.f32.mrf.mxu0
    %v1382 = vadd.f32 %v1285, %v1381
    %v1383 = vpop.f32.mrf.mxu0
    %v1384 = vpop.f32.mrf.mxu0
    %v1385 = vadd.f32 %v1288, %v1384
    %v1386 = vpop.f32.mrf.mxu0
    %1387 = vmatprep.mubr.bf16.mxu0 0
    %1388 = vmatmul.mubr.bf16.gmra.mxu0 %v1146
    %v1389 = vpop.f32.mrf.mxu0
    %v1390 = vadd.f32 %v1293, %v1389
    %v1391 = vpop.f32.mrf.mxu0
    %v1392 = vpop.f32.mrf.mxu0
    %v1393 = vadd.f32 %v1296, %v1392
    %v1394 = vpop.f32.mrf.mxu0
    %1395 = vdwg.mxu0
    %s1396 = scalar_lea.vmem [#allocation3], 128
    %v1397 = vld [vmem:[%s1396] sm:$0xf]
    %v1398 = vld [vmem:[%s1396 + $0x4] sm:$0xf]
    %v1399 = vld [vmem:[%s1396 + $0x8] sm:$0xf]
    %v1400 = vld [vmem:[%s1396 + $0xc] sm:$0xf]
    %v1401 = vld [vmem:[%s1396 + $0x10] sm:$0xf]
    %v1402 = vld [vmem:[%s1396 + $0x14] sm:$0xf]
    %v1403 = vld [vmem:[%s1396 + $0x18] sm:$0xf]
    %v1404 = vld [vmem:[%s1396 + $0x1c] sm:$0xf]
    %v1405 = vld [vmem:[%s1396 + $0x20] sm:$0xf]
    %v1406 = vld [vmem:[%s1396 + $0x24] sm:$0xf]
    %v1407 = vld [vmem:[%s1396 + $0x28] sm:$0xf]
    %v1408 = vld [vmem:[%s1396 + $0x2c] sm:$0xf]
    %v1409 = vld [vmem:[%s1396 + $0x30] sm:$0xf]
    %v1410 = vld [vmem:[%s1396 + $0x34] sm:$0xf]
    %v1411 = vld [vmem:[%s1396 + $0x38] sm:$0xf]
    %v1412 = vld [vmem:[%s1396 + $0x3c] sm:$0xf]
    %v1429 = vunpack.c.l.b16 %v1397
    %v1430 = vunpack.c.l.b16 %v1398
    %v1431 = vunpack.c.l.b16 %v1399
    %v1432 = vunpack.c.l.b16 %v1400
    %v1433 = vunpack.c.l.b16 %v1401
    %v1434 = vunpack.c.l.b16 %v1402
    %v1435 = vunpack.c.l.b16 %v1403
    %v1436 = vunpack.c.l.b16 %v1404
    %v1437 = vunpack.c.l.b16 %v1405
    %v1438 = vunpack.c.l.b16 %v1406
    %v1439 = vunpack.c.l.b16 %v1407
    %v1440 = vunpack.c.l.b16 %v1408
    %v1441 = vunpack.c.l.b16 %v1409
    %v1442 = vunpack.c.l.b16 %v1410
    %v1443 = vunpack.c.l.b16 %v1411
    %v1444 = vunpack.c.l.b16 %v1412
    %v1445 = vpack.c.b16 %v1430, %v1429
    %v1446 = vpack.c.b16 %v1432, %v1431
    %v1447 = vpack.c.b16 %v1434, %v1433
    %v1448 = vpack.c.b16 %v1436, %v1435
    %v1449 = vpack.c.b16 %v1438, %v1437
    %v1450 = vpack.c.b16 %v1440, %v1439
    %v1451 = vpack.c.b16 %v1442, %v1441
    %v1452 = vpack.c.b16 %v1444, %v1443
    %1461 = vmatprep.subr.bf16.mxu0 0
    %1462 = vmatpush1.bf16.msra.mxu0 %v1452
    %1463 = vmatprep.subr.bf16.mxu0 0
    %1464 = vmatpush1.bf16.msra.mxu0 %v1451
    %1465 = vmatprep.subr.bf16.mxu0 0
    %1466 = vmatpush1.bf16.msra.mxu0 %v1450
    %1467 = vmatprep.subr.bf16.mxu0 0
    %1468 = vmatpush1.bf16.msra.mxu0 %v1449
    %1469 = vmatprep.subr.bf16.mxu0 0
    %1470 = vmatpush1.bf16.msra.mxu0 %v1448
    %1471 = vmatprep.subr.bf16.mxu0 0
    %1472 = vmatpush1.bf16.msra.mxu0 %v1447
    %1473 = vmatprep.subr.bf16.mxu0 0
    %1474 = vmatpush1.bf16.msra.mxu0 %v1446
    %1475 = vmatprep.subr.bf16.mxu0 0
    %1476 = vmatpush1.bf16.msra.mxu0 %v1445
    %1477 = vmatprep.subr.bf16.mxu0 0
    %1478 = vmatpush2.bf16.msra.mxu0 0
    %1479 = vmatprep.subr.bf16.mxu0 0
    %1480 = vmatpush2.bf16.msra.mxu0 0
    %1481 = vmatprep.subr.bf16.mxu0 0
    %1482 = vmatpush2.bf16.msra.mxu0 0
    %1483 = vmatprep.subr.bf16.mxu0 0
    %1484 = vmatpush2.bf16.msra.mxu0 0
    %1485 = vmatprep.subr.bf16.mxu0 0
    %1486 = vmatpush2.bf16.msra.mxu0 0
    %1487 = vmatprep.subr.bf16.mxu0 0
    %1488 = vmatpush2.bf16.msra.mxu0 0
    %1489 = vmatprep.subr.bf16.mxu0 0
    %1490 = vmatpush2.bf16.msra.mxu0 0
    %1491 = vmatprep.subr.bf16.mxu0 0
    %1492 = vmatpush2.bf16.msra.mxu0 0
    %1493 = vmatprep.mubr.bf16.mxu0 0
    %1494 = vmatmul.mubr.bf16.gmra.mxu0 %v1149
    %v1495 = vpop.f32.mrf.mxu0
    %v1496 = vadd.f32 0.0, %v1495
    %v1497 = vpop.f32.mrf.mxu0
    %v1498 = vpop.f32.mrf.mxu0
    %v1499 = vadd.f32 0.0, %v1498
    %v1500 = vpop.f32.mrf.mxu0
    %1501 = vmatprep.mubr.bf16.mxu0 0
    %1502 = vmatmul.mubr.bf16.gmra.mxu0 %v1150
    %v1503 = vpop.f32.mrf.mxu0
    %v1504 = vadd.f32 0.0, %v1503
    %v1505 = vpop.f32.mrf.mxu0
    %v1506 = vpop.f32.mrf.mxu0
    %v1507 = vadd.f32 0.0, %v1506
    %v1508 = vpop.f32.mrf.mxu0
    %1509 = vdwg.mxu0
    %v1510 = vadd.f32 %v1382, %v1496
    %v1511 = vadd.f32 %v1385, %v1499
    %v1512 = vadd.f32 %v1390, %v1504
    %v1513 = vadd.f32 %v1393, %v1507
    %s1514 = scalar_lea.vmem [#allocation3], 192
    %v1515 = vld [vmem:[%s1514] sm:$0xf]
    %v1516 = vld [vmem:[%s1514 + $0x4] sm:$0xf]
    %v1517 = vld [vmem:[%s1514 + $0x8] sm:$0xf]
    %v1518 = vld [vmem:[%s1514 + $0xc] sm:$0xf]
    %v1519 = vld [vmem:[%s1514 + $0x10] sm:$0xf]
    %v1520 = vld [vmem:[%s1514 + $0x14] sm:$0xf]
    %v1521 = vld [vmem:[%s1514 + $0x18] sm:$0xf]
    %v1522 = vld [vmem:[%s1514 + $0x1c] sm:$0xf]
    %v1523 = vld [vmem:[%s1514 + $0x20] sm:$0xf]
    %v1524 = vld [vmem:[%s1514 + $0x24] sm:$0xf]
    %v1525 = vld [vmem:[%s1514 + $0x28] sm:$0xf]
    %v1526 = vld [vmem:[%s1514 + $0x2c] sm:$0xf]
    %v1527 = vld [vmem:[%s1514 + $0x30] sm:$0xf]
    %v1528 = vld [vmem:[%s1514 + $0x34] sm:$0xf]
    %v1529 = vld [vmem:[%s1514 + $0x38] sm:$0xf]
    %v1530 = vld [vmem:[%s1514 + $0x3c] sm:$0xf]
    %v1547 = vunpack.c.l.b16 %v1515
    %v1548 = vunpack.c.l.b16 %v1516
    %v1549 = vunpack.c.l.b16 %v1517
    %v1550 = vunpack.c.l.b16 %v1518
    %v1551 = vunpack.c.l.b16 %v1519
    %v1552 = vunpack.c.l.b16 %v1520
    %v1553 = vunpack.c.l.b16 %v1521
    %v1554 = vunpack.c.l.b16 %v1522
    %v1555 = vunpack.c.l.b16 %v1523
    %v1556 = vunpack.c.l.b16 %v1524
    %v1557 = vunpack.c.l.b16 %v1525
    %v1558 = vunpack.c.l.b16 %v1526
    %v1559 = vunpack.c.l.b16 %v1527
    %v1560 = vunpack.c.l.b16 %v1528
    %v1561 = vunpack.c.l.b16 %v1529
    %v1562 = vunpack.c.l.b16 %v1530
    %v1563 = vpack.c.b16 %v1548, %v1547
    %v1564 = vpack.c.b16 %v1550, %v1549
    %v1565 = vpack.c.b16 %v1552, %v1551
    %v1566 = vpack.c.b16 %v1554, %v1553
    %v1567 = vpack.c.b16 %v1556, %v1555
    %v1568 = vpack.c.b16 %v1558, %v1557
    %v1569 = vpack.c.b16 %v1560, %v1559
    %v1570 = vpack.c.b16 %v1562, %v1561
    %1579 = vmatprep.subr.bf16.mxu0 0
    %1580 = vmatpush1.bf16.msra.mxu0 %v1570
    %1581 = vmatprep.subr.bf16.mxu0 0
    %1582 = vmatpush1.bf16.msra.mxu0 %v1569
    %1583 = vmatprep.subr.bf16.mxu0 0
    %1584 = vmatpush1.bf16.msra.mxu0 %v1568
    %1585 = vmatprep.subr.bf16.mxu0 0
    %1586 = vmatpush1.bf16.msra.mxu0 %v1567
    %1587 = vmatprep.subr.bf16.mxu0 0
    %1588 = vmatpush1.bf16.msra.mxu0 %v1566
    %1589 = vmatprep.subr.bf16.mxu0 0
    %1590 = vmatpush1.bf16.msra.mxu0 %v1565
    %1591 = vmatprep.subr.bf16.mxu0 0
    %1592 = vmatpush1.bf16.msra.mxu0 %v1564
    %1593 = vmatprep.subr.bf16.mxu0 0
    %1594 = vmatpush1.bf16.msra.mxu0 %v1563
    %1595 = vmatprep.subr.bf16.mxu0 0
    %1596 = vmatpush2.bf16.msra.mxu0 0
    %1597 = vmatprep.subr.bf16.mxu0 0
    %1598 = vmatpush2.bf16.msra.mxu0 0
    %1599 = vmatprep.subr.bf16.mxu0 0
    %1600 = vmatpush2.bf16.msra.mxu0 0
    %1601 = vmatprep.subr.bf16.mxu0 0
    %1602 = vmatpush2.bf16.msra.mxu0 0
    %1603 = vmatprep.subr.bf16.mxu0 0
    %1604 = vmatpush2.bf16.msra.mxu0 0
    %1605 = vmatprep.subr.bf16.mxu0 0
    %1606 = vmatpush2.bf16.msra.mxu0 0
    %1607 = vmatprep.subr.bf16.mxu0 0
    %1608 = vmatpush2.bf16.msra.mxu0 0
    %1609 = vmatprep.subr.bf16.mxu0 0
    %1610 = vmatpush2.bf16.msra.mxu0 0
    %1611 = vmatprep.mubr.bf16.mxu0 0
    %1612 = vmatmul.mubr.bf16.gmra.mxu0 %v1151
    %v1613 = vpop.f32.mrf.mxu0
    %v1614 = vadd.f32 0.0, %v1613
    %v1615 = vpop.f32.mrf.mxu0
    %v1616 = vpop.f32.mrf.mxu0
    %v1617 = vadd.f32 0.0, %v1616
    %v1618 = vpop.f32.mrf.mxu0
    %1619 = vmatprep.mubr.bf16.mxu0 0
    %1620 = vmatmul.mubr.bf16.gmra.mxu0 %v1152
    %v1621 = vpop.f32.mrf.mxu0
    %v1622 = vadd.f32 0.0, %v1621
    %v1623 = vpop.f32.mrf.mxu0
    %v1624 = vpop.f32.mrf.mxu0
    %v1625 = vadd.f32 0.0, %v1624
    %v1626 = vpop.f32.mrf.mxu0
    %1627 = vdwg.mxu0
    %v1628 = vadd.f32 %v1510, %v1614
    %v1629 = vadd.f32 %v1511, %v1617
    %v1630 = vadd.f32 %v1512, %v1622
    %v1631 = vadd.f32 %v1513, %v1625
    %s1632 = scalar_lea.vmem [#allocation3], 256
    %v1633 = vld [vmem:[%s1632] sm:$0xf]
    %v1634 = vld [vmem:[%s1632 + $0x4] sm:$0xf]
    %v1635 = vld [vmem:[%s1632 + $0x8] sm:$0xf]
    %v1636 = vld [vmem:[%s1632 + $0xc] sm:$0xf]
    %v1637 = vld [vmem:[%s1632 + $0x10] sm:$0xf]
    %v1638 = vld [vmem:[%s1632 + $0x14] sm:$0xf]
    %v1639 = vld [vmem:[%s1632 + $0x18] sm:$0xf]
    %v1640 = vld [vmem:[%s1632 + $0x1c] sm:$0xf]
    %v1641 = vld [vmem:[%s1632 + $0x20] sm:$0xf]
    %v1642 = vld [vmem:[%s1632 + $0x24] sm:$0xf]
    %v1643 = vld [vmem:[%s1632 + $0x28] sm:$0xf]
    %v1644 = vld [vmem:[%s1632 + $0x2c] sm:$0xf]
    %v1645 = vld [vmem:[%s1632 + $0x30] sm:$0xf]
    %v1646 = vld [vmem:[%s1632 + $0x34] sm:$0xf]
    %v1647 = vld [vmem:[%s1632 + $0x38] sm:$0xf]
    %v1648 = vld [vmem:[%s1632 + $0x3c] sm:$0xf]
    %v1665 = vunpack.c.l.b16 %v1633
    %v1666 = vunpack.c.l.b16 %v1634
    %v1667 = vunpack.c.l.b16 %v1635
    %v1668 = vunpack.c.l.b16 %v1636
    %v1669 = vunpack.c.l.b16 %v1637
    %v1670 = vunpack.c.l.b16 %v1638
    %v1671 = vunpack.c.l.b16 %v1639
    %v1672 = vunpack.c.l.b16 %v1640
    %v1673 = vunpack.c.l.b16 %v1641
    %v1674 = vunpack.c.l.b16 %v1642
    %v1675 = vunpack.c.l.b16 %v1643
    %v1676 = vunpack.c.l.b16 %v1644
    %v1677 = vunpack.c.l.b16 %v1645
    %v1678 = vunpack.c.l.b16 %v1646
    %v1679 = vunpack.c.l.b16 %v1647
    %v1680 = vunpack.c.l.b16 %v1648
    %v1681 = vpack.c.b16 %v1666, %v1665
    %v1682 = vpack.c.b16 %v1668, %v1667
    %v1683 = vpack.c.b16 %v1670, %v1669
    %v1684 = vpack.c.b16 %v1672, %v1671
    %v1685 = vpack.c.b16 %v1674, %v1673
    %v1686 = vpack.c.b16 %v1676, %v1675
    %v1687 = vpack.c.b16 %v1678, %v1677
    %v1688 = vpack.c.b16 %v1680, %v1679
    %1697 = vmatprep.subr.bf16.mxu0 0
    %1698 = vmatpush1.bf16.msra.mxu0 %v1688
    %1699 = vmatprep.subr.bf16.mxu0 0
    %1700 = vmatpush1.bf16.msra.mxu0 %v1687
    %1701 = vmatprep.subr.bf16.mxu0 0
    %1702 = vmatpush1.bf16.msra.mxu0 %v1686
    %1703 = vmatprep.subr.bf16.mxu0 0
    %1704 = vmatpush1.bf16.msra.mxu0 %v1685
    %1705 = vmatprep.subr.bf16.mxu0 0
    %1706 = vmatpush1.bf16.msra.mxu0 %v1684
    %1707 = vmatprep.subr.bf16.mxu0 0
    %1708 = vmatpush1.bf16.msra.mxu0 %v1683
    %1709 = vmatprep.subr.bf16.mxu0 0
    %1710 = vmatpush1.bf16.msra.mxu0 %v1682
    %1711 = vmatprep.subr.bf16.mxu0 0
    %1712 = vmatpush1.bf16.msra.mxu0 %v1681
    %1713 = vmatprep.subr.bf16.mxu0 0
    %1714 = vmatpush2.bf16.msra.mxu0 0
    %1715 = vmatprep.subr.bf16.mxu0 0
    %1716 = vmatpush2.bf16.msra.mxu0 0
    %1717 = vmatprep.subr.bf16.mxu0 0
    %1718 = vmatpush2.bf16.msra.mxu0 0
    %1719 = vmatprep.subr.bf16.mxu0 0
    %1720 = vmatpush2.bf16.msra.mxu0 0
    %1721 = vmatprep.subr.bf16.mxu0 0
    %1722 = vmatpush2.bf16.msra.mxu0 0
    %1723 = vmatprep.subr.bf16.mxu0 0
    %1724 = vmatpush2.bf16.msra.mxu0 0
    %1725 = vmatprep.subr.bf16.mxu0 0
    %1726 = vmatpush2.bf16.msra.mxu0 0
    %1727 = vmatprep.subr.bf16.mxu0 0
    %1728 = vmatpush2.bf16.msra.mxu0 0
    %1729 = vmatprep.mubr.bf16.mxu0 0
    %1730 = vmatmul.mubr.bf16.gmra.mxu0 %v1153
    %v1731 = vpop.f32.mrf.mxu0
    %v1732 = vadd.f32 0.0, %v1731
    %v1733 = vpop.f32.mrf.mxu0
    %v1734 = vpop.f32.mrf.mxu0
    %v1735 = vadd.f32 0.0, %v1734
    %v1736 = vpop.f32.mrf.mxu0
    %1737 = vmatprep.mubr.bf16.mxu0 0
    %1738 = vmatmul.mubr.bf16.gmra.mxu0 %v1154
    %v1739 = vpop.f32.mrf.mxu0
    %v1740 = vadd.f32 0.0, %v1739
    %v1741 = vpop.f32.mrf.mxu0
    %v1742 = vpop.f32.mrf.mxu0
    %v1743 = vadd.f32 0.0, %v1742
    %v1744 = vpop.f32.mrf.mxu0
    %1745 = vdwg.mxu0
    %v1746 = vadd.f32 %v1628, %v1732
    %v1747 = vadd.f32 %v1629, %v1735
    %v1748 = vadd.f32 %v1630, %v1740
    %v1749 = vadd.f32 %v1631, %v1743
    %s1750 = scalar_lea.vmem [#allocation3], 320
    %v1751 = vld [vmem:[%s1750] sm:$0xf]
    %v1752 = vld [vmem:[%s1750 + $0x4] sm:$0xf]
    %v1753 = vld [vmem:[%s1750 + $0x8] sm:$0xf]
    %v1754 = vld [vmem:[%s1750 + $0xc] sm:$0xf]
    %v1755 = vld [vmem:[%s1750 + $0x10] sm:$0xf]
    %v1756 = vld [vmem:[%s1750 + $0x14] sm:$0xf]
    %v1757 = vld [vmem:[%s1750 + $0x18] sm:$0xf]
    %v1758 = vld [vmem:[%s1750 + $0x1c] sm:$0xf]
    %v1759 = vld [vmem:[%s1750 + $0x20] sm:$0xf]
    %v1760 = vld [vmem:[%s1750 + $0x24] sm:$0xf]
    %v1761 = vld [vmem:[%s1750 + $0x28] sm:$0xf]
    %v1762 = vld [vmem:[%s1750 + $0x2c] sm:$0xf]
    %v1763 = vld [vmem:[%s1750 + $0x30] sm:$0xf]
    %v1764 = vld [vmem:[%s1750 + $0x34] sm:$0xf]
    %v1765 = vld [vmem:[%s1750 + $0x38] sm:$0xf]
    %v1766 = vld [vmem:[%s1750 + $0x3c] sm:$0xf]
    %v1783 = vunpack.c.l.b16 %v1751
    %v1784 = vunpack.c.l.b16 %v1752
    %v1785 = vunpack.c.l.b16 %v1753
    %v1786 = vunpack.c.l.b16 %v1754
    %v1787 = vunpack.c.l.b16 %v1755
    %v1788 = vunpack.c.l.b16 %v1756
    %v1789 = vunpack.c.l.b16 %v1757
    %v1790 = vunpack.c.l.b16 %v1758
    %v1791 = vunpack.c.l.b16 %v1759
    %v1792 = vunpack.c.l.b16 %v1760
    %v1793 = vunpack.c.l.b16 %v1761
    %v1794 = vunpack.c.l.b16 %v1762
    %v1795 = vunpack.c.l.b16 %v1763
    %v1796 = vunpack.c.l.b16 %v1764
    %v1797 = vunpack.c.l.b16 %v1765
    %v1798 = vunpack.c.l.b16 %v1766
    %v1799 = vpack.c.b16 %v1784, %v1783
    %v1800 = vpack.c.b16 %v1786, %v1785
    %v1801 = vpack.c.b16 %v1788, %v1787
    %v1802 = vpack.c.b16 %v1790, %v1789
    %v1803 = vpack.c.b16 %v1792, %v1791
    %v1804 = vpack.c.b16 %v1794, %v1793
    %v1805 = vpack.c.b16 %v1796, %v1795
    %v1806 = vpack.c.b16 %v1798, %v1797
    %1815 = vmatprep.subr.bf16.mxu0 0
    %1816 = vmatpush1.bf16.msra.mxu0 %v1806
    %1817 = vmatprep.subr.bf16.mxu0 0
    %1818 = vmatpush1.bf16.msra.mxu0 %v1805
    %1819 = vmatprep.subr.bf16.mxu0 0
    %1820 = vmatpush1.bf16.msra.mxu0 %v1804
    %1821 = vmatprep.subr.bf16.mxu0 0
    %1822 = vmatpush1.bf16.msra.mxu0 %v1803
    %1823 = vmatprep.subr.bf16.mxu0 0
    %1824 = vmatpush1.bf16.msra.mxu0 %v1802
    %1825 = vmatprep.subr.bf16.mxu0 0
    %1826 = vmatpush1.bf16.msra.mxu0 %v1801
    %1827 = vmatprep.subr.bf16.mxu0 0
    %1828 = vmatpush1.bf16.msra.mxu0 %v1800
    %1829 = vmatprep.subr.bf16.mxu0 0
    %1830 = vmatpush1.bf16.msra.mxu0 %v1799
    %1831 = vmatprep.subr.bf16.mxu0 0
    %1832 = vmatpush2.bf16.msra.mxu0 0
    %1833 = vmatprep.subr.bf16.mxu0 0
    %1834 = vmatpush2.bf16.msra.mxu0 0
    %1835 = vmatprep.subr.bf16.mxu0 0
    %1836 = vmatpush2.bf16.msra.mxu0 0
    %1837 = vmatprep.subr.bf16.mxu0 0
    %1838 = vmatpush2.bf16.msra.mxu0 0
    %1839 = vmatprep.subr.bf16.mxu0 0
    %1840 = vmatpush2.bf16.msra.mxu0 0
    %1841 = vmatprep.subr.bf16.mxu0 0
    %1842 = vmatpush2.bf16.msra.mxu0 0
    %1843 = vmatprep.subr.bf16.mxu0 0
    %1844 = vmatpush2.bf16.msra.mxu0 0
    %1845 = vmatprep.subr.bf16.mxu0 0
    %1846 = vmatpush2.bf16.msra.mxu0 0
    %1847 = vmatprep.mubr.bf16.mxu0 0
    %1848 = vmatmul.mubr.bf16.gmra.mxu0 %v1155
    %v1849 = vpop.f32.mrf.mxu0
    %v1850 = vadd.f32 0.0, %v1849
    %v1851 = vpop.f32.mrf.mxu0
    %v1852 = vpop.f32.mrf.mxu0
    %v1853 = vadd.f32 0.0, %v1852
    %v1854 = vpop.f32.mrf.mxu0
    %1855 = vmatprep.mubr.bf16.mxu0 0
    %1856 = vmatmul.mubr.bf16.gmra.mxu0 %v1156
    %v1857 = vpop.f32.mrf.mxu0
    %v1858 = vadd.f32 0.0, %v1857
    %v1859 = vpop.f32.mrf.mxu0
    %v1860 = vpop.f32.mrf.mxu0
    %v1861 = vadd.f32 0.0, %v1860
    %v1862 = vpop.f32.mrf.mxu0
    %1863 = vdwg.mxu0
    %v1864 = vadd.f32 %v1746, %v1850
    %v1865 = vadd.f32 %v1747, %v1853
    %v1866 = vadd.f32 %v1748, %v1858
    %v1867 = vadd.f32 %v1749, %v1861
    %s1868 = scalar_lea.vmem [#allocation3], 384
    %v1869 = vld [vmem:[%s1868] sm:$0xf]
    %v1870 = vld [vmem:[%s1868 + $0x4] sm:$0xf]
    %v1871 = vld [vmem:[%s1868 + $0x8] sm:$0xf]
    %v1872 = vld [vmem:[%s1868 + $0xc] sm:$0xf]
    %v1873 = vld [vmem:[%s1868 + $0x10] sm:$0xf]
    %v1874 = vld [vmem:[%s1868 + $0x14] sm:$0xf]
    %v1875 = vld [vmem:[%s1868 + $0x18] sm:$0xf]
    %v1876 = vld [vmem:[%s1868 + $0x1c] sm:$0xf]
    %v1877 = vld [vmem:[%s1868 + $0x20] sm:$0xf]
    %v1878 = vld [vmem:[%s1868 + $0x24] sm:$0xf]
    %v1879 = vld [vmem:[%s1868 + $0x28] sm:$0xf]
    %v1880 = vld [vmem:[%s1868 + $0x2c] sm:$0xf]
    %v1881 = vld [vmem:[%s1868 + $0x30] sm:$0xf]
    %v1882 = vld [vmem:[%s1868 + $0x34] sm:$0xf]
    %v1883 = vld [vmem:[%s1868 + $0x38] sm:$0xf]
    %v1884 = vld [vmem:[%s1868 + $0x3c] sm:$0xf]
    %v1901 = vunpack.c.l.b16 %v1869
    %v1902 = vunpack.c.l.b16 %v1870
    %v1903 = vunpack.c.l.b16 %v1871
    %v1904 = vunpack.c.l.b16 %v1872
    %v1905 = vunpack.c.l.b16 %v1873
    %v1906 = vunpack.c.l.b16 %v1874
    %v1907 = vunpack.c.l.b16 %v1875
    %v1908 = vunpack.c.l.b16 %v1876
    %v1909 = vunpack.c.l.b16 %v1877
    %v1910 = vunpack.c.l.b16 %v1878
    %v1911 = vunpack.c.l.b16 %v1879
    %v1912 = vunpack.c.l.b16 %v1880
    %v1913 = vunpack.c.l.b16 %v1881
    %v1914 = vunpack.c.l.b16 %v1882
    %v1915 = vunpack.c.l.b16 %v1883
    %v1916 = vunpack.c.l.b16 %v1884
    %v1917 = vpack.c.b16 %v1902, %v1901
    %v1918 = vpack.c.b16 %v1904, %v1903
    %v1919 = vpack.c.b16 %v1906, %v1905
    %v1920 = vpack.c.b16 %v1908, %v1907
    %v1921 = vpack.c.b16 %v1910, %v1909
    %v1922 = vpack.c.b16 %v1912, %v1911
    %v1923 = vpack.c.b16 %v1914, %v1913
    %v1924 = vpack.c.b16 %v1916, %v1915
    %1933 = vmatprep.subr.bf16.mxu0 0
    %1934 = vmatpush1.bf16.msra.mxu0 %v1924
    %1935 = vmatprep.subr.bf16.mxu0 0
    %1936 = vmatpush1.bf16.msra.mxu0 %v1923
    %1937 = vmatprep.subr.bf16.mxu0 0
    %1938 = vmatpush1.bf16.msra.mxu0 %v1922
    %1939 = vmatprep.subr.bf16.mxu0 0
    %1940 = vmatpush1.bf16.msra.mxu0 %v1921
    %1941 = vmatprep.subr.bf16.mxu0 0
    %1942 = vmatpush1.bf16.msra.mxu0 %v1920
    %1943 = vmatprep.subr.bf16.mxu0 0
    %1944 = vmatpush1.bf16.msra.mxu0 %v1919
    %1945 = vmatprep.subr.bf16.mxu0 0
    %1946 = vmatpush1.bf16.msra.mxu0 %v1918
    %1947 = vmatprep.subr.bf16.mxu0 0
    %1948 = vmatpush1.bf16.msra.mxu0 %v1917
    %1949 = vmatprep.subr.bf16.mxu0 0
    %1950 = vmatpush2.bf16.msra.mxu0 0
    %1951 = vmatprep.subr.bf16.mxu0 0
    %1952 = vmatpush2.bf16.msra.mxu0 0
    %1953 = vmatprep.subr.bf16.mxu0 0
    %1954 = vmatpush2.bf16.msra.mxu0 0
    %1955 = vmatprep.subr.bf16.mxu0 0
    %1956 = vmatpush2.bf16.msra.mxu0 0
    %1957 = vmatprep.subr.bf16.mxu0 0
    %1958 = vmatpush2.bf16.msra.mxu0 0
    %1959 = vmatprep.subr.bf16.mxu0 0
    %1960 = vmatpush2.bf16.msra.mxu0 0
    %1961 = vmatprep.subr.bf16.mxu0 0
    %1962 = vmatpush2.bf16.msra.mxu0 0
    %1963 = vmatprep.subr.bf16.mxu0 0
    %1964 = vmatpush2.bf16.msra.mxu0 0
    %1965 = vmatprep.mubr.bf16.mxu0 0
    %1966 = vmatmul.mubr.bf16.gmra.mxu0 %v1157
    %v1967 = vpop.f32.mrf.mxu0
    %v1968 = vadd.f32 0.0, %v1967
    %v1969 = vpop.f32.mrf.mxu0
    %v1970 = vpop.f32.mrf.mxu0
    %v1971 = vadd.f32 0.0, %v1970
    %v1972 = vpop.f32.mrf.mxu0
    %1973 = vmatprep.mubr.bf16.mxu0 0
    %1974 = vmatmul.mubr.bf16.gmra.mxu0 %v1158
    %v1975 = vpop.f32.mrf.mxu0
    %v1976 = vadd.f32 0.0, %v1975
    %v1977 = vpop.f32.mrf.mxu0
    %v1978 = vpop.f32.mrf.mxu0
    %v1979 = vadd.f32 0.0, %v1978
    %v1980 = vpop.f32.mrf.mxu0
    %1981 = vdwg.mxu0
    %v1982 = vadd.f32 %v1864, %v1968
    %v1983 = vadd.f32 %v1865, %v1971
    %v1984 = vadd.f32 %v1866, %v1976
    %v1985 = vadd.f32 %v1867, %v1979
    %s1986 = scalar_lea.vmem [#allocation3], 448
    %v1987 = vld [vmem:[%s1986] sm:$0xf]
    %v1988 = vld [vmem:[%s1986 + $0x4] sm:$0xf]
    %v1989 = vld [vmem:[%s1986 + $0x8] sm:$0xf]
    %v1990 = vld [vmem:[%s1986 + $0xc] sm:$0xf]
    %v1991 = vld [vmem:[%s1986 + $0x10] sm:$0xf]
    %v1992 = vld [vmem:[%s1986 + $0x14] sm:$0xf]
    %v1993 = vld [vmem:[%s1986 + $0x18] sm:$0xf]
    %v1994 = vld [vmem:[%s1986 + $0x1c] sm:$0xf]
    %v1995 = vld [vmem:[%s1986 + $0x20] sm:$0xf]
    %v1996 = vld [vmem:[%s1986 + $0x24] sm:$0xf]
    %v1997 = vld [vmem:[%s1986 + $0x28] sm:$0xf]
    %v1998 = vld [vmem:[%s1986 + $0x2c] sm:$0xf]
    %v1999 = vld [vmem:[%s1986 + $0x30] sm:$0xf]
    %v2000 = vld [vmem:[%s1986 + $0x34] sm:$0xf]
    %v2001 = vld [vmem:[%s1986 + $0x38] sm:$0xf]
    %v2002 = vld [vmem:[%s1986 + $0x3c] sm:$0xf]
    %v2019 = vunpack.c.l.b16 %v1987
    %v2020 = vunpack.c.l.b16 %v1988
    %v2021 = vunpack.c.l.b16 %v1989
    %v2022 = vunpack.c.l.b16 %v1990
    %v2023 = vunpack.c.l.b16 %v1991
    %v2024 = vunpack.c.l.b16 %v1992
    %v2025 = vunpack.c.l.b16 %v1993
    %v2026 = vunpack.c.l.b16 %v1994
    %v2027 = vunpack.c.l.b16 %v1995
    %v2028 = vunpack.c.l.b16 %v1996
    %v2029 = vunpack.c.l.b16 %v1997
    %v2030 = vunpack.c.l.b16 %v1998
    %v2031 = vunpack.c.l.b16 %v1999
    %v2032 = vunpack.c.l.b16 %v2000
    %v2033 = vunpack.c.l.b16 %v2001
    %v2034 = vunpack.c.l.b16 %v2002
    %v2035 = vpack.c.b16 %v2020, %v2019
    %v2036 = vpack.c.b16 %v2022, %v2021
    %v2037 = vpack.c.b16 %v2024, %v2023
    %v2038 = vpack.c.b16 %v2026, %v2025
    %v2039 = vpack.c.b16 %v2028, %v2027
    %v2040 = vpack.c.b16 %v2030, %v2029
    %v2041 = vpack.c.b16 %v2032, %v2031
    %v2042 = vpack.c.b16 %v2034, %v2033
    %2051 = vmatprep.subr.bf16.mxu0 0
    %2052 = vmatpush1.bf16.msra.mxu0 %v2042
    %2053 = vmatprep.subr.bf16.mxu0 0
    %2054 = vmatpush1.bf16.msra.mxu0 %v2041
    %2055 = vmatprep.subr.bf16.mxu0 0
    %2056 = vmatpush1.bf16.msra.mxu0 %v2040
    %2057 = vmatprep.subr.bf16.mxu0 0
    %2058 = vmatpush1.bf16.msra.mxu0 %v2039
    %2059 = vmatprep.subr.bf16.mxu0 0
    %2060 = vmatpush1.bf16.msra.mxu0 %v2038
    %2061 = vmatprep.subr.bf16.mxu0 0
    %2062 = vmatpush1.bf16.msra.mxu0 %v2037
    %2063 = vmatprep.subr.bf16.mxu0 0
    %2064 = vmatpush1.bf16.msra.mxu0 %v2036
    %2065 = vmatprep.subr.bf16.mxu0 0
    %2066 = vmatpush1.bf16.msra.mxu0 %v2035
    %2067 = vmatprep.subr.bf16.mxu0 0
    %2068 = vmatpush2.bf16.msra.mxu0 0
    %2069 = vmatprep.subr.bf16.mxu0 0
    %2070 = vmatpush2.bf16.msra.mxu0 0
    %2071 = vmatprep.subr.bf16.mxu0 0
    %2072 = vmatpush2.bf16.msra.mxu0 0
    %2073 = vmatprep.subr.bf16.mxu0 0
    %2074 = vmatpush2.bf16.msra.mxu0 0
    %2075 = vmatprep.subr.bf16.mxu0 0
    %2076 = vmatpush2.bf16.msra.mxu0 0
    %2077 = vmatprep.subr.bf16.mxu0 0
    %2078 = vmatpush2.bf16.msra.mxu0 0
    %2079 = vmatprep.subr.bf16.mxu0 0
    %2080 = vmatpush2.bf16.msra.mxu0 0
    %2081 = vmatprep.subr.bf16.mxu0 0
    %2082 = vmatpush2.bf16.msra.mxu0 0
    %2083 = vmatprep.mubr.bf16.mxu0 0
    %2084 = vmatmul.mubr.bf16.gmra.mxu0 %v1159
    %v2085 = vpop.f32.mrf.mxu0
    %v2086 = vadd.f32 0.0, %v2085
    %v2087 = vpop.f32.mrf.mxu0
    %v2088 = vpop.f32.mrf.mxu0
    %v2089 = vadd.f32 0.0, %v2088
    %v2090 = vpop.f32.mrf.mxu0
    %2091 = vmatprep.mubr.bf16.mxu0 0
    %2092 = vmatmul.mubr.bf16.gmra.mxu0 %v1160
    %v2093 = vpop.f32.mrf.mxu0
    %v2094 = vadd.f32 0.0, %v2093
    %v2095 = vpop.f32.mrf.mxu0
    %v2096 = vpop.f32.mrf.mxu0
    %v2097 = vadd.f32 0.0, %v2096
    %v2098 = vpop.f32.mrf.mxu0
    %2099 = vdwg.mxu0
    %v2100 = vadd.f32 %v1982, %v2086
    %v2101 = vadd.f32 %v1983, %v2089
    %v2102 = vadd.f32 %v1984, %v2094
    %v2103 = vadd.f32 %v1985, %v2097
    %s2104 = scalar_lea.vmem [#allocation3], 512
    %v2105 = vld [vmem:[%s2104] sm:$0xf]
    %v2106 = vld [vmem:[%s2104 + $0x4] sm:$0xf]
    %v2107 = vld [vmem:[%s2104 + $0x8] sm:$0xf]
    %v2108 = vld [vmem:[%s2104 + $0xc] sm:$0xf]
    %v2109 = vld [vmem:[%s2104 + $0x10] sm:$0xf]
    %v2110 = vld [vmem:[%s2104 + $0x14] sm:$0xf]
    %v2111 = vld [vmem:[%s2104 + $0x18] sm:$0xf]
    %v2112 = vld [vmem:[%s2104 + $0x1c] sm:$0xf]
    %v2113 = vld [vmem:[%s2104 + $0x20] sm:$0xf]
    %v2114 = vld [vmem:[%s2104 + $0x24] sm:$0xf]
    %v2115 = vld [vmem:[%s2104 + $0x28] sm:$0xf]
    %v2116 = vld [vmem:[%s2104 + $0x2c] sm:$0xf]
    %v2117 = vld [vmem:[%s2104 + $0x30] sm:$0xf]
    %v2118 = vld [vmem:[%s2104 + $0x34] sm:$0xf]
    %v2119 = vld [vmem:[%s2104 + $0x38] sm:$0xf]
    %v2120 = vld [vmem:[%s2104 + $0x3c] sm:$0xf]
    %v2137 = vunpack.c.l.b16 %v2105
    %v2138 = vunpack.c.l.b16 %v2106
    %v2139 = vunpack.c.l.b16 %v2107
    %v2140 = vunpack.c.l.b16 %v2108
    %v2141 = vunpack.c.l.b16 %v2109
    %v2142 = vunpack.c.l.b16 %v2110
    %v2143 = vunpack.c.l.b16 %v2111
    %v2144 = vunpack.c.l.b16 %v2112
    %v2145 = vunpack.c.l.b16 %v2113
    %v2146 = vunpack.c.l.b16 %v2114
    %v2147 = vunpack.c.l.b16 %v2115
    %v2148 = vunpack.c.l.b16 %v2116
    %v2149 = vunpack.c.l.b16 %v2117
    %v2150 = vunpack.c.l.b16 %v2118
    %v2151 = vunpack.c.l.b16 %v2119
    %v2152 = vunpack.c.l.b16 %v2120
    %v2153 = vpack.c.b16 %v2138, %v2137
    %v2154 = vpack.c.b16 %v2140, %v2139
    %v2155 = vpack.c.b16 %v2142, %v2141
    %v2156 = vpack.c.b16 %v2144, %v2143
    %v2157 = vpack.c.b16 %v2146, %v2145
    %v2158 = vpack.c.b16 %v2148, %v2147
    %v2159 = vpack.c.b16 %v2150, %v2149
    %v2160 = vpack.c.b16 %v2152, %v2151
    %2169 = vmatprep.subr.bf16.mxu0 0
    %2170 = vmatpush1.bf16.msra.mxu0 %v2160
    %2171 = vmatprep.subr.bf16.mxu0 0
    %2172 = vmatpush1.bf16.msra.mxu0 %v2159
    %2173 = vmatprep.subr.bf16.mxu0 0
    %2174 = vmatpush1.bf16.msra.mxu0 %v2158
    %2175 = vmatprep.subr.bf16.mxu0 0
    %2176 = vmatpush1.bf16.msra.mxu0 %v2157
    %2177 = vmatprep.subr.bf16.mxu0 0
    %2178 = vmatpush1.bf16.msra.mxu0 %v2156
    %2179 = vmatprep.subr.bf16.mxu0 0
    %2180 = vmatpush1.bf16.msra.mxu0 %v2155
    %2181 = vmatprep.subr.bf16.mxu0 0
    %2182 = vmatpush1.bf16.msra.mxu0 %v2154
    %2183 = vmatprep.subr.bf16.mxu0 0
    %2184 = vmatpush1.bf16.msra.mxu0 %v2153
    %2185 = vmatprep.subr.bf16.mxu0 0
    %2186 = vmatpush2.bf16.msra.mxu0 0
    %2187 = vmatprep.subr.bf16.mxu0 0
    %2188 = vmatpush2.bf16.msra.mxu0 0
    %2189 = vmatprep.subr.bf16.mxu0 0
    %2190 = vmatpush2.bf16.msra.mxu0 0
    %2191 = vmatprep.subr.bf16.mxu0 0
    %2192 = vmatpush2.bf16.msra.mxu0 0
    %2193 = vmatprep.subr.bf16.mxu0 0
    %2194 = vmatpush2.bf16.msra.mxu0 0
    %2195 = vmatprep.subr.bf16.mxu0 0
    %2196 = vmatpush2.bf16.msra.mxu0 0
    %2197 = vmatprep.subr.bf16.mxu0 0
    %2198 = vmatpush2.bf16.msra.mxu0 0
    %2199 = vmatprep.subr.bf16.mxu0 0
    %2200 = vmatpush2.bf16.msra.mxu0 0
    %2201 = vmatprep.mubr.bf16.mxu0 0
    %2202 = vmatmul.mubr.bf16.gmra.mxu0 %v1161
    %v2203 = vpop.f32.mrf.mxu0
    %v2204 = vadd.f32 0.0, %v2203
    %v2205 = vpop.f32.mrf.mxu0
    %v2206 = vpop.f32.mrf.mxu0
    %v2207 = vadd.f32 0.0, %v2206
    %v2208 = vpop.f32.mrf.mxu0
    %2209 = vmatprep.mubr.bf16.mxu0 0
    %2210 = vmatmul.mubr.bf16.gmra.mxu0 %v1162
    %v2211 = vpop.f32.mrf.mxu0
    %v2212 = vadd.f32 0.0, %v2211
    %v2213 = vpop.f32.mrf.mxu0
    %v2214 = vpop.f32.mrf.mxu0
    %v2215 = vadd.f32 0.0, %v2214
    %v2216 = vpop.f32.mrf.mxu0
    %2217 = vdwg.mxu0
    %v2218 = vadd.f32 %v2100, %v2204
    %v2219 = vadd.f32 %v2101, %v2207
    %v2220 = vadd.f32 %v2102, %v2212
    %v2221 = vadd.f32 %v2103, %v2215
    %s2222 = scalar_lea.vmem [#allocation3], 576
    %v2223 = vld [vmem:[%s2222] sm:$0xf]
    %v2224 = vld [vmem:[%s2222 + $0x4] sm:$0xf]
    %v2225 = vld [vmem:[%s2222 + $0x8] sm:$0xf]
    %v2226 = vld [vmem:[%s2222 + $0xc] sm:$0xf]
    %v2227 = vld [vmem:[%s2222 + $0x10] sm:$0xf]
    %v2228 = vld [vmem:[%s2222 + $0x14] sm:$0xf]
    %v2229 = vld [vmem:[%s2222 + $0x18] sm:$0xf]
    %v2230 = vld [vmem:[%s2222 + $0x1c] sm:$0xf]
    %v2231 = vld [vmem:[%s2222 + $0x20] sm:$0xf]
    %v2232 = vld [vmem:[%s2222 + $0x24] sm:$0xf]
    %v2233 = vld [vmem:[%s2222 + $0x28] sm:$0xf]
    %v2234 = vld [vmem:[%s2222 + $0x2c] sm:$0xf]
    %v2235 = vld [vmem:[%s2222 + $0x30] sm:$0xf]
    %v2236 = vld [vmem:[%s2222 + $0x34] sm:$0xf]
    %v2237 = vld [vmem:[%s2222 + $0x38] sm:$0xf]
    %v2238 = vld [vmem:[%s2222 + $0x3c] sm:$0xf]
    %v2255 = vunpack.c.l.b16 %v2223
    %v2256 = vunpack.c.l.b16 %v2224
    %v2257 = vunpack.c.l.b16 %v2225
    %v2258 = vunpack.c.l.b16 %v2226
    %v2259 = vunpack.c.l.b16 %v2227
    %v2260 = vunpack.c.l.b16 %v2228
    %v2261 = vunpack.c.l.b16 %v2229
    %v2262 = vunpack.c.l.b16 %v2230
    %v2263 = vunpack.c.l.b16 %v2231
    %v2264 = vunpack.c.l.b16 %v2232
    %v2265 = vunpack.c.l.b16 %v2233
    %v2266 = vunpack.c.l.b16 %v2234
    %v2267 = vunpack.c.l.b16 %v2235
    %v2268 = vunpack.c.l.b16 %v2236
    %v2269 = vunpack.c.l.b16 %v2237
    %v2270 = vunpack.c.l.b16 %v2238
    %v2271 = vpack.c.b16 %v2256, %v2255
    %v2272 = vpack.c.b16 %v2258, %v2257
    %v2273 = vpack.c.b16 %v2260, %v2259
    %v2274 = vpack.c.b16 %v2262, %v2261
    %v2275 = vpack.c.b16 %v2264, %v2263
    %v2276 = vpack.c.b16 %v2266, %v2265
    %v2277 = vpack.c.b16 %v2268, %v2267
    %v2278 = vpack.c.b16 %v2270, %v2269
    %2287 = vmatprep.subr.bf16.mxu0 0
    %2288 = vmatpush1.bf16.msra.mxu0 %v2278
    %2289 = vmatprep.subr.bf16.mxu0 0
    %2290 = vmatpush1.bf16.msra.mxu0 %v2277
    %2291 = vmatprep.subr.bf16.mxu0 0
    %2292 = vmatpush1.bf16.msra.mxu0 %v2276
    %2293 = vmatprep.subr.bf16.mxu0 0
    %2294 = vmatpush1.bf16.msra.mxu0 %v2275
    %2295 = vmatprep.subr.bf16.mxu0 0
    %2296 = vmatpush1.bf16.msra.mxu0 %v2274
    %2297 = vmatprep.subr.bf16.mxu0 0
    %2298 = vmatpush1.bf16.msra.mxu0 %v2273
    %2299 = vmatprep.subr.bf16.mxu0 0
    %2300 = vmatpush1.bf16.msra.mxu0 %v2272
    %2301 = vmatprep.subr.bf16.mxu0 0
    %2302 = vmatpush1.bf16.msra.mxu0 %v2271
    %2303 = vmatprep.subr.bf16.mxu0 0
    %2304 = vmatpush2.bf16.msra.mxu0 0
    %2305 = vmatprep.subr.bf16.mxu0 0
    %2306 = vmatpush2.bf16.msra.mxu0 0
    %2307 = vmatprep.subr.bf16.mxu0 0
    %2308 = vmatpush2.bf16.msra.mxu0 0
    %2309 = vmatprep.subr.bf16.mxu0 0
    %2310 = vmatpush2.bf16.msra.mxu0 0
    %2311 = vmatprep.subr.bf16.mxu0 0
    %2312 = vmatpush2.bf16.msra.mxu0 0
    %2313 = vmatprep.subr.bf16.mxu0 0
    %2314 = vmatpush2.bf16.msra.mxu0 0
    %2315 = vmatprep.subr.bf16.mxu0 0
    %2316 = vmatpush2.bf16.msra.mxu0 0
    %2317 = vmatprep.subr.bf16.mxu0 0
    %2318 = vmatpush2.bf16.msra.mxu0 0
    %2319 = vmatprep.mubr.bf16.mxu0 0
    %2320 = vmatmul.mubr.bf16.gmra.mxu0 %v1163
    %v2321 = vpop.f32.mrf.mxu0
    %v2322 = vadd.f32 0.0, %v2321
    %v2323 = vpop.f32.mrf.mxu0
    %v2324 = vpop.f32.mrf.mxu0
    %v2325 = vadd.f32 0.0, %v2324
    %v2326 = vpop.f32.mrf.mxu0
    %2327 = vmatprep.mubr.bf16.mxu0 0
    %2328 = vmatmul.mubr.bf16.gmra.mxu0 %v1164
    %v2329 = vpop.f32.mrf.mxu0
    %v2330 = vadd.f32 0.0, %v2329
    %v2331 = vpop.f32.mrf.mxu0
    %v2332 = vpop.f32.mrf.mxu0
    %v2333 = vadd.f32 0.0, %v2332
    %v2334 = vpop.f32.mrf.mxu0
    %2335 = vdwg.mxu0
    %v2336 = vadd.f32 %v2218, %v2322
    %v2337 = vadd.f32 %v2219, %v2325
    %v2338 = vadd.f32 %v2220, %v2330
    %v2339 = vadd.f32 %v2221, %v2333
    %s2340 = scalar_lea.vmem [#allocation3], 640
    %v2341 = vld [vmem:[%s2340] sm:$0xf]
    %v2342 = vld [vmem:[%s2340 + $0x4] sm:$0xf]
    %v2343 = vld [vmem:[%s2340 + $0x8] sm:$0xf]
    %v2344 = vld [vmem:[%s2340 + $0xc] sm:$0xf]
    %v2345 = vld [vmem:[%s2340 + $0x10] sm:$0xf]
    %v2346 = vld [vmem:[%s2340 + $0x14] sm:$0xf]
    %v2347 = vld [vmem:[%s2340 + $0x18] sm:$0xf]
    %v2348 = vld [vmem:[%s2340 + $0x1c] sm:$0xf]
    %v2349 = vld [vmem:[%s2340 + $0x20] sm:$0xf]
    %v2350 = vld [vmem:[%s2340 + $0x24] sm:$0xf]
    %v2351 = vld [vmem:[%s2340 + $0x28] sm:$0xf]
    %v2352 = vld [vmem:[%s2340 + $0x2c] sm:$0xf]
    %v2353 = vld [vmem:[%s2340 + $0x30] sm:$0xf]
    %v2354 = vld [vmem:[%s2340 + $0x34] sm:$0xf]
    %v2355 = vld [vmem:[%s2340 + $0x38] sm:$0xf]
    %v2356 = vld [vmem:[%s2340 + $0x3c] sm:$0xf]
    %v2373 = vunpack.c.l.b16 %v2341
    %v2374 = vunpack.c.l.b16 %v2342
    %v2375 = vunpack.c.l.b16 %v2343
    %v2376 = vunpack.c.l.b16 %v2344
    %v2377 = vunpack.c.l.b16 %v2345
    %v2378 = vunpack.c.l.b16 %v2346
    %v2379 = vunpack.c.l.b16 %v2347
    %v2380 = vunpack.c.l.b16 %v2348
    %v2381 = vunpack.c.l.b16 %v2349
    %v2382 = vunpack.c.l.b16 %v2350
    %v2383 = vunpack.c.l.b16 %v2351
    %v2384 = vunpack.c.l.b16 %v2352
    %v2385 = vunpack.c.l.b16 %v2353
    %v2386 = vunpack.c.l.b16 %v2354
    %v2387 = vunpack.c.l.b16 %v2355
    %v2388 = vunpack.c.l.b16 %v2356
    %v2389 = vpack.c.b16 %v2374, %v2373
    %v2390 = vpack.c.b16 %v2376, %v2375
    %v2391 = vpack.c.b16 %v2378, %v2377
    %v2392 = vpack.c.b16 %v2380, %v2379
    %v2393 = vpack.c.b16 %v2382, %v2381
    %v2394 = vpack.c.b16 %v2384, %v2383
    %v2395 = vpack.c.b16 %v2386, %v2385
    %v2396 = vpack.c.b16 %v2388, %v2387
    %2405 = vmatprep.subr.bf16.mxu0 0
    %2406 = vmatpush1.bf16.msra.mxu0 %v2396
    %2407 = vmatprep.subr.bf16.mxu0 0
    %2408 = vmatpush1.bf16.msra.mxu0 %v2395
    %2409 = vmatprep.subr.bf16.mxu0 0
    %2410 = vmatpush1.bf16.msra.mxu0 %v2394
    %2411 = vmatprep.subr.bf16.mxu0 0
    %2412 = vmatpush1.bf16.msra.mxu0 %v2393
    %2413 = vmatprep.subr.bf16.mxu0 0
    %2414 = vmatpush1.bf16.msra.mxu0 %v2392
    %2415 = vmatprep.subr.bf16.mxu0 0
    %2416 = vmatpush1.bf16.msra.mxu0 %v2391
    %2417 = vmatprep.subr.bf16.mxu0 0
    %2418 = vmatpush1.bf16.msra.mxu0 %v2390
    %2419 = vmatprep.subr.bf16.mxu0 0
    %2420 = vmatpush1.bf16.msra.mxu0 %v2389
    %2421 = vmatprep.subr.bf16.mxu0 0
    %2422 = vmatpush2.bf16.msra.mxu0 0
    %2423 = vmatprep.subr.bf16.mxu0 0
    %2424 = vmatpush2.bf16.msra.mxu0 0
    %2425 = vmatprep.subr.bf16.mxu0 0
    %2426 = vmatpush2.bf16.msra.mxu0 0
    %2427 = vmatprep.subr.bf16.mxu0 0
    %2428 = vmatpush2.bf16.msra.mxu0 0
    %2429 = vmatprep.subr.bf16.mxu0 0
    %2430 = vmatpush2.bf16.msra.mxu0 0
    %2431 = vmatprep.subr.bf16.mxu0 0
    %2432 = vmatpush2.bf16.msra.mxu0 0
    %2433 = vmatprep.subr.bf16.mxu0 0
    %2434 = vmatpush2.bf16.msra.mxu0 0
    %2435 = vmatprep.subr.bf16.mxu0 0
    %2436 = vmatpush2.bf16.msra.mxu0 0
    %2437 = vmatprep.mubr.bf16.mxu0 0
    %2438 = vmatmul.mubr.bf16.gmra.mxu0 %v1165
    %v2439 = vpop.f32.mrf.mxu0
    %v2440 = vadd.f32 0.0, %v2439
    %v2441 = vpop.f32.mrf.mxu0
    %v2442 = vpop.f32.mrf.mxu0
    %v2443 = vadd.f32 0.0, %v2442
    %v2444 = vpop.f32.mrf.mxu0
    %2445 = vmatprep.mubr.bf16.mxu0 0
    %2446 = vmatmul.mubr.bf16.gmra.mxu0 %v1166
    %v2447 = vpop.f32.mrf.mxu0
    %v2448 = vadd.f32 0.0, %v2447
    %v2449 = vpop.f32.mrf.mxu0
    %v2450 = vpop.f32.mrf.mxu0
    %v2451 = vadd.f32 0.0, %v2450
    %v2452 = vpop.f32.mrf.mxu0
    %2453 = vdwg.mxu0
    %v2454 = vadd.f32 %v2336, %v2440
    %v2455 = vadd.f32 %v2337, %v2443
    %v2456 = vadd.f32 %v2338, %v2448
    %v2457 = vadd.f32 %v2339, %v2451
    %s2458 = scalar_lea.vmem [#allocation3], 704
    %v2459 = vld [vmem:[%s2458] sm:$0xf]
    %v2460 = vld [vmem:[%s2458 + $0x4] sm:$0xf]
    %v2461 = vld [vmem:[%s2458 + $0x8] sm:$0xf]
    %v2462 = vld [vmem:[%s2458 + $0xc] sm:$0xf]
    %v2463 = vld [vmem:[%s2458 + $0x10] sm:$0xf]
    %v2464 = vld [vmem:[%s2458 + $0x14] sm:$0xf]
    %v2465 = vld [vmem:[%s2458 + $0x18] sm:$0xf]
    %v2466 = vld [vmem:[%s2458 + $0x1c] sm:$0xf]
    %v2467 = vld [vmem:[%s2458 + $0x20] sm:$0xf]
    %v2468 = vld [vmem:[%s2458 + $0x24] sm:$0xf]
    %v2469 = vld [vmem:[%s2458 + $0x28] sm:$0xf]
    %v2470 = vld [vmem:[%s2458 + $0x2c] sm:$0xf]
    %v2471 = vld [vmem:[%s2458 + $0x30] sm:$0xf]
    %v2472 = vld [vmem:[%s2458 + $0x34] sm:$0xf]
    %v2473 = vld [vmem:[%s2458 + $0x38] sm:$0xf]
    %v2474 = vld [vmem:[%s2458 + $0x3c] sm:$0xf]
    %v2491 = vunpack.c.l.b16 %v2459
    %v2492 = vunpack.c.l.b16 %v2460
    %v2493 = vunpack.c.l.b16 %v2461
    %v2494 = vunpack.c.l.b16 %v2462
    %v2495 = vunpack.c.l.b16 %v2463
    %v2496 = vunpack.c.l.b16 %v2464
    %v2497 = vunpack.c.l.b16 %v2465
    %v2498 = vunpack.c.l.b16 %v2466
    %v2499 = vunpack.c.l.b16 %v2467
    %v2500 = vunpack.c.l.b16 %v2468
    %v2501 = vunpack.c.l.b16 %v2469
    %v2502 = vunpack.c.l.b16 %v2470
    %v2503 = vunpack.c.l.b16 %v2471
    %v2504 = vunpack.c.l.b16 %v2472
    %v2505 = vunpack.c.l.b16 %v2473
    %v2506 = vunpack.c.l.b16 %v2474
    %v2507 = vpack.c.b16 %v2492, %v2491
    %v2508 = vpack.c.b16 %v2494, %v2493
    %v2509 = vpack.c.b16 %v2496, %v2495
    %v2510 = vpack.c.b16 %v2498, %v2497
    %v2511 = vpack.c.b16 %v2500, %v2499
    %v2512 = vpack.c.b16 %v2502, %v2501
    %v2513 = vpack.c.b16 %v2504, %v2503
    %v2514 = vpack.c.b16 %v2506, %v2505
    %2523 = vmatprep.subr.bf16.mxu0 0
    %2524 = vmatpush1.bf16.msra.mxu0 %v2514
    %2525 = vmatprep.subr.bf16.mxu0 0
    %2526 = vmatpush1.bf16.msra.mxu0 %v2513
    %2527 = vmatprep.subr.bf16.mxu0 0
    %2528 = vmatpush1.bf16.msra.mxu0 %v2512
    %2529 = vmatprep.subr.bf16.mxu0 0
    %2530 = vmatpush1.bf16.msra.mxu0 %v2511
    %2531 = vmatprep.subr.bf16.mxu0 0
    %2532 = vmatpush1.bf16.msra.mxu0 %v2510
    %2533 = vmatprep.subr.bf16.mxu0 0
    %2534 = vmatpush1.bf16.msra.mxu0 %v2509
    %2535 = vmatprep.subr.bf16.mxu0 0
    %2536 = vmatpush1.bf16.msra.mxu0 %v2508
    %2537 = vmatprep.subr.bf16.mxu0 0
    %2538 = vmatpush1.bf16.msra.mxu0 %v2507
    %2539 = vmatprep.subr.bf16.mxu0 0
    %2540 = vmatpush2.bf16.msra.mxu0 0
    %2541 = vmatprep.subr.bf16.mxu0 0
    %2542 = vmatpush2.bf16.msra.mxu0 0
    %2543 = vmatprep.subr.bf16.mxu0 0
    %2544 = vmatpush2.bf16.msra.mxu0 0
    %2545 = vmatprep.subr.bf16.mxu0 0
    %2546 = vmatpush2.bf16.msra.mxu0 0
    %2547 = vmatprep.subr.bf16.mxu0 0
    %2548 = vmatpush2.bf16.msra.mxu0 0
    %2549 = vmatprep.subr.bf16.mxu0 0
    %2550 = vmatpush2.bf16.msra.mxu0 0
    %2551 = vmatprep.subr.bf16.mxu0 0
    %2552 = vmatpush2.bf16.msra.mxu0 0
    %2553 = vmatprep.subr.bf16.mxu0 0
    %2554 = vmatpush2.bf16.msra.mxu0 0
    %2555 = vmatprep.mubr.bf16.mxu0 0
    %2556 = vmatmul.mubr.bf16.gmra.mxu0 %v1167
    %v2557 = vpop.f32.mrf.mxu0
    %v2558 = vadd.f32 0.0, %v2557
    %v2559 = vpop.f32.mrf.mxu0
    %v2560 = vpop.f32.mrf.mxu0
    %v2561 = vadd.f32 0.0, %v2560
    %v2562 = vpop.f32.mrf.mxu0
    %2563 = vmatprep.mubr.bf16.mxu0 0
    %2564 = vmatmul.mubr.bf16.gmra.mxu0 %v1168
    %v2565 = vpop.f32.mrf.mxu0
    %v2566 = vadd.f32 0.0, %v2565
    %v2567 = vpop.f32.mrf.mxu0
    %v2568 = vpop.f32.mrf.mxu0
    %v2569 = vadd.f32 0.0, %v2568
    %v2570 = vpop.f32.mrf.mxu0
    %2571 = vdwg.mxu0
    %v2572 = vadd.f32 %v2454, %v2558
    %v2573 = vadd.f32 %v2455, %v2561
    %v2574 = vadd.f32 %v2456, %v2566
    %v2575 = vadd.f32 %v2457, %v2569
    %v2576 = vld [vmem:[%s6] sm:$0x1]
    %v2578 = vlaneseq
    %v2579 = vshrl.u32 %v2578, 7
    %v2580 = vsub.s32 0, %v2579
    %v2581 = vrot.slane %v2576, %v2580
    %v2583 = vadd.f32 %v2572, %v2581
    %v2584 = vadd.f32 %v2573, %v2581
    %v2585 = vadd.f32 %v2574, %v2581
    %v2586 = vadd.f32 %v2575, %v2581
    %v2587 = vmax.f32 %v2583, 0.0
    %v2588 = vmax.f32 %v2584, 0.0
    %v2589 = vmax.f32 %v2585, 0.0
    %v2590 = vmax.f32 %v2586, 0.0
    %v2591 = vld [vmem:[%s7] sm:$0x1]
    %v2593 = vlaneseq
    %v2594 = vshrl.u32 %v2593, 7
    %v2595 = vsub.s32 0, %v2594
    %v2596 = vrot.slane %v2591, %v2595
    %v2598 = vmul.f32 %v2587, %v2596
    %v2599 = vmul.f32 %v2588, %v2596
    %v2600 = vmul.f32 %v2589, %v2596
    %v2601 = vmul.f32 %v2590, %v2596
    %2602 = vadd.xlane.f32.xlu0 %v2598
    %v2603 = vpop.xlane.xlu0 %2602
    %2604 = vadd.xlane.f32.xlu0 %v2599
    %v2605 = vpop.xlane.xlu0 %2604
    %2606 = vadd.xlane.f32.xlu0 %v2600
    %v2607 = vpop.xlane.xlu0 %2606
    %2608 = vadd.xlane.f32.xlu0 %v2601
    %v2609 = vpop.xlane.xlu0 %2608
    %v2610 = vld [vmem:[#allocation2] sm:$0x1]
    %v2612 = vlaneseq
    %v2613 = vshrl.u32 %v2612, 7
    %v2614 = vsub.s32 0, %v2613
    %v2615 = vrot.slane %v2610, %v2614
    %v2617 = vadd.f32 %v2603, %v2615
    %v2618 = vadd.f32 %v2605, %v2615
    %v2619 = vadd.f32 %v2607, %v2615
    %v2620 = vadd.f32 %v2609, %v2615
    %vm2621 = vcmask 7168
    %2622 = vst.msk [vmem:[%s9] sm:$0xff] %vm2621, %v2617
    %2623 = vst.msk [vmem:[%s9 + $0x8] sm:$0xff] %vm2621, %v2618
    %2624 = vst.msk [vmem:[%s9 + $0x10] sm:$0xff] %vm2621, %v2619
    %2625 = vst.msk [vmem:[%s9 + $0x18] sm:$0xff] %vm2621, %v2620
    // Predicated region
    $region42: #{tpu_custom_call.1} parent=1 // pred_check
      _
    $region43: #{tpu_custom_call.1} parent=1 // pred_check_branch
      %2627 = sbr.rel (0) target = $region45
    $region44: #{tpu_custom_call.1} parent=1 // pred_region
      _
    $region45: #{tpu_custom_call.1} parent=1 // pred_fallthru
      _
    // Predicated region
    $region46: #{tpu_custom_call.1} parent=1 // pred_check
      _
    $region47: #{tpu_custom_call.1} parent=1 // pred_check_branch
      %2629 = sbr.rel (0) target = $region49
    $region48: #{tpu_custom_call.1} parent=1 // pred_region
      _
    $region49: #{tpu_custom_call.1} parent=1 // pred_fallthru
      _
    %2630 = vsyncpa [#allocation4], 1

</llo_original>
